<compile_context>
chip_gen: v7x
topology: tpu7x:2x2x1
jax: 0.10.0
libtpu: 0.0.40
codegen_flags: <defaults>
</compile_context>

<pallas_src>
import functools

import jax
import jax.numpy as jnp
from jax.experimental import pallas as pl
from jax.experimental.pallas import tpu as pltpu


# ----------------------------------------------------------------------------
# Helpers
# ----------------------------------------------------------------------------
def _align8(v):
    return -(-v // 8) * 8


def _tap_masks(h, w):
    """(9, H*W) f32 validity masks for the 3x3 taps (dy, dx) in row-major order."""
    hw = h * w
    idx = jnp.arange(hw, dtype=jnp.int32)
    y = idx // w
    x = idx % w
    rows = []
    for dy in (-1, 0, 1):
        for dx in (-1, 0, 1):
            ok = (y + dy >= 0) & (y + dy < h) & (x + dx >= 0) & (x + dx < w)
            rows.append(ok.astype(jnp.float32))
    return jnp.stack(rows, axis=0)


def _weight_layout(cin, cout, mid, growth, depth, num_blocks):
    """Static (8-row-aligned) offsets of every weight/bias inside the packed slabs."""
    w1, w3, bias = {}, {}, {}
    o1 = o3 = ob = 0

    def add1(name, rows, cols):
        nonlocal o1
        w1[name] = (o1, rows, cols)
        o1 += _align8(rows)

    def add3(name, rows, cols):
        nonlocal o3
        w3[name] = (o3, rows, cols)
        o3 += _align8(rows)

    def addb(name, rows):
        nonlocal ob
        bias[name] = (ob, rows)
        ob += _align8(rows)

    add1("in", mid, cin); addb("in", mid)
    for bi in range(num_blocks):
        c = mid
        for li in range(depth):
            add1(f"b{bi}l{li}c1", c, c); addb(f"b{bi}l{li}c1", c)
            add3(f"b{bi}l{li}c3", growth, 9 * c); addb(f"b{bi}l{li}c3", growth)
            c += growth
        add1(f"b{bi}out", mid, c); addb(f"b{bi}out", mid)
    add1("out", cout, mid); addb("out", cout)
    return w1, w3, bias, o1, o3, ob


def _pick_b_tile(n, hw, cin, cout, cmax, c3max):
    """Largest power-of-two batch tile that divides n, keeps >=2 grid steps (v7x
    megacore) and keeps scratch + blocks comfortably inside v7x's 64 MiB VMEM."""
    if n <= 1:
        return 1
    bytes_per_img = 4 * hw * (9 * c3max + cmax + 4 * cin + 2 * cout + 9)
    budget = 24 * 2 ** 20
    for b in (16, 8, 4, 2):
        if n % b == 0 and n // b >= 2 and b * bytes_per_img <= budget:
            return b
    return 1


# ----------------------------------------------------------------------------
# Fused ContextInit kernel (one grid step per B_TILE-image group)
# ----------------------------------------------------------------------------
def _make_fused_kernel(*, h, w, lane, mid, growth, num_blocks, depth,
                       w1map, w3map, bmap):
    taps = [(dy, dx) for dy in (-1, 0, 1) for dx in (-1, 0, 1)]

    def kernel(x_ref, u_ref, m_ref, w1_ref, w3_ref, b_ref, o_ref, hb_ref, slab_ref):
        def W1(name):
            off, r, c = w1map[name]
            return w1_ref[off:off + r, 0:c]

        def W3(name):
            off, r, c = w3map[name]
            return w3_ref[off:off + r, 0:c]

        def B(name):
            off, r = bmap[name]
            return b_ref[off:off + r, :]

        # Border masks: loaded once, reused in every block/layer.
        m_all = m_ref[...]
        msks = [m_all[k:k + 1, :] for k in range(9)]

        # UniformDequantization + shift(-0.5) are folded into W1("in")/B("in").
        z = x_ref[0] + u_ref[0]                                            # (cin, lane)
        hcur = jnp.dot(W1("in"), z, preferred_element_type=jnp.float32) + B("in")

        for bi in range(num_blocks):
            hb_ref[0:mid, :] = hcur
            c = mid
            for li in range(depth):
                # 1x1 conv + ReLU on the growing dense slice.
                t = jnp.dot(W1(f"b{bi}l{li}c1"), hb_ref[0:c, :],
                            preferred_element_type=jnp.float32) + B(f"b{bi}l{li}c1")
                t = jnp.maximum(t, 0.0)                                    # (c, lane)

                # 3x3 conv (padding=1) as a single im2col matmul: 9 lane-rolls of t,
                # border-masked (masks also kill any cross-image leakage when several
                # images share the lane axis), written into the VMEM slab.  Centre
                # tap is stored straight from t.
                for k, (dy, dx) in enumerate(taps):
                    if dy == 0 and dx == 0:
                        slab_ref[k * c:(k + 1) * c, :] = t
                    else:
                        shift = (-(dy * w + dx)) % lane
                        slab_ref[k * c:(k + 1) * c, :] = (
                            pltpu.roll(t, shift, axis=1) * msks[k])
                t3 = jnp.dot(W3(f"b{bi}l{li}c3"), slab_ref[0:9 * c, :],
                             preferred_element_type=jnp.float32) + B(f"b{bi}l{li}c3")
                t3 = jnp.maximum(t3, 0.0)                                  # (growth, lane)

                # Dense connection: slice-write into pre-sized scratch (no concat).
                hb_ref[c:c + growth, :] = t3
                c = c + growth

            hcur = jnp.dot(W1(f"b{bi}out"), hb_ref[0:c, :],
                           preferred_element_type=jnp.float32) + B(f"b{bi}out")

        out = jnp.dot(W1("out"), hcur, preferred_element_type=jnp.float32) + B("out")
        o_ref[0] = out.astype(o_ref.dtype)                                 # lane-dense store

    return kernel


# ----------------------------------------------------------------------------
# Forward wrapper (NCHW in / NCHW out)
# ----------------------------------------------------------------------------
def context_init_forward(params, x_nchw, u_nchw, *, num_bits, mid_channels,
                         num_blocks, depth, b_tile=None):
    n, cin, h, w = x_nchw.shape
    hw = h * w
    inv_bins = 1.0 / float(2 ** num_bits)
    xf = x_nchw.reshape(n, cin, hw).astype(jnp.float32)
    uf = u_nchw.reshape(n, cin, hw).astype(jnp.float32)

    if not (mid_channels > 0 and num_blocks > 0 and depth > 0):
        # encode is None: only dequant + shift (tiled, lane-dense elementwise kernel).
        rows = n * cin
        tr = next(t for t in (512, 256, 128, 64, 32, 16, 8, 4, 2, 1) if rows % t == 0)

        def _dq_kernel(x_ref, u_ref, o_ref):
            o_ref[...] = (x_ref[...] + u_ref[...]) * inv_bins - 0.5

        z = pl.pallas_call(
            _dq_kernel,
            out_shape=jax.ShapeDtypeStruct((rows, hw), jnp.float32),
            grid=(rows // tr,),
            in_specs=[pl.BlockSpec((tr, hw), lambda i: (i, 0)),
                      pl.BlockSpec((tr, hw), lambda i: (i, 0))],
            out_specs=pl.BlockSpec((tr, hw), lambda i: (i, 0)),
            compiler_params=pltpu.CompilerParams(dimension_semantics=("parallel",)),
        )(xf.reshape(rows, hw), uf.reshape(rows, hw))
        return z.reshape(n, cin, h, w)

    mid = mid_channels
    growth = params["blocks"][0]["layers"][0]["c3"]["w"].shape[3]
    cout = params["out"]["w"].shape[1]
    cmax = mid + depth * growth             # widest dense activation
    c3max = mid + (depth - 1) * growth      # widest 3x3-conv input
    w1cols = max(cmax, cin)

    b = b_tile if b_tile is not None else _pick_b_tile(n, hw, cin, cout, cmax, c3max)
    assert n % b == 0, "b_tile must divide the batch size"
    nt = n // b
    lane = b * hw

    # Channels-major with the batch tile stacked along the lane axis: (nt, C, B*HW).
    x3 = xf.reshape(nt, b, cin, hw).transpose(0, 2, 1, 3).reshape(nt, cin, lane)
    u3 = uf.reshape(nt, b, cin, hw).transpose(0, 2, 1, 3).reshape(nt, cin, lane)
    masks = jnp.tile(_tap_masks(h, w), (1, b))                              # (9, lane)

    # ---- pack all weights / biases into 3 slabs (few DMAs, no tiny-ref padding).
    w1map, w3map, bmap, r1, r3, rb = _weight_layout(cin, cout, mid, growth, depth, num_blocks)
    w1_slab = jnp.zeros((r1, w1cols), jnp.float32)
    w3_slab = jnp.zeros((r3, 9 * c3max), jnp.float32)
    b_slab = jnp.zeros((rb, 1), jnp.float32)

    def put1(name, wmat):
        nonlocal w1_slab
        off, rr, cc = w1map[name]
        w1_slab = w1_slab.at[off:off + rr, 0:cc].set(wmat)

    def put3(name, wmat):
        nonlocal w3_slab
        off, rr, cc = w3map[name]
        w3_slab = w3_slab.at[off:off + rr, 0:cc].set(wmat)

    def putb(name, vec):
        nonlocal b_slab
        off, rr = bmap[name]
        b_slab = b_slab.at[off:off + rr, :].set(vec.reshape(-1, 1))

    # Dequant (/2^bits) and shift (-0.5) folded into the first 1x1 conv.
    w_in_t = params["in"]["w"].T                                            # (mid, cin)
    put1("in", inv_bins * w_in_t)
    putb("in", params["in"]["b"] - 0.5 * w_in_t.sum(axis=1))
    for bi, blk in enumerate(params["blocks"]):
        c = mid
        for li, layer in enumerate(blk["layers"]):
            put1(f"b{bi}l{li}c1", layer["c1"]["w"].T)
            putb(f"b{bi}l{li}c1", layer["c1"]["b"])
            put3(f"b{bi}l{li}c3", layer["c3"]["w"].reshape(9 * c, growth).T)
            putb(f"b{bi}l{li}c3", layer["c3"]["b"])
            c += growth
        put1(f"b{bi}out", blk["out"]["w"].T)
        putb(f"b{bi}out", blk["out"]["b"])
    put1("out", params["out"]["w"].T)
    putb("out", params["out"]["b"])

    kernel = _make_fused_kernel(h=h, w=w, lane=lane, mid=mid, growth=growth,
                                num_blocks=num_blocks, depth=depth,
                                w1map=w1map, w3map=w3map, bmap=bmap)

    # Rough VMEM budget (scratch + double-buffered blocks + slabs) and FLOP estimate.
    vmem_est = (4 * lane * (9 * c3max + cmax)
                + 2 * 4 * lane * (2 * cin + cout + 9)
                + 2 * 4 * (r1 * w1cols + r3 * 9 * c3max + rb * 128))
    flops_img = 2 * mid * cin * hw + 2 * cout * mid * hw
    for _ in range(num_blocks):
        ci = mid
        for _ in range(depth):
            flops_img += 2 * ci * ci * hw + 2 * growth * 9 * ci * hw
            ci += growth
        flops_img += 2 * mid * ci * hw
    cost = pl.CostEstimate(
        flops=flops_img * n, transcendentals=0,
        bytes_accessed=int(4 * (x3.size + u3.size + n * cout * hw + w1_slab.size
                                + w3_slab.size + b_slab.size + masks.size)))

    out = pl.pallas_call(
        kernel,
        out_shape=jax.ShapeDtypeStruct((nt, cout, lane), jnp.float32),
        grid=(nt,),
        in_specs=[
            pl.BlockSpec((1, cin, lane), lambda i: (i, 0, 0)),
            pl.BlockSpec((1, cin, lane), lambda i: (i, 0, 0)),
            pl.BlockSpec((9, lane), lambda i: (0, 0)),
            pl.BlockSpec((r1, w1cols), lambda i: (0, 0)),
            pl.BlockSpec((r3, 9 * c3max), lambda i: (0, 0)),
            pl.BlockSpec((rb, 1), lambda i: (0, 0)),
        ],
        out_specs=pl.BlockSpec((1, cout, lane), lambda i: (i, 0, 0)),
        scratch_shapes=[pltpu.VMEM((cmax, lane), jnp.float32),        # dense activations
                        pltpu.VMEM((9 * c3max, lane), jnp.float32)],  # im2col slab
        compiler_params=pltpu.CompilerParams(
            dimension_semantics=("parallel",),
            vmem_limit_bytes=int(min(60 * 2 ** 20, max(32 * 2 ** 20, 2 * vmem_est)))),
        cost_estimate=cost,
    )(x3, u3, masks, w1_slab, w3_slab, b_slab)

    # (nt, Cout, B*HW) -> NCHW: pull the batch tile back out of the lane axis.
    # TODO(synk): dropout is p=0.0 in this config (identity at inference), so omitted.
    return out.reshape(nt, cout, b, hw).transpose(0, 2, 1, 3).reshape(n, cout, h, w)


# ----------------------------------------------------------------------------
# Parameter init (deterministic, PyTorch-ish uniform(-1/sqrt(fan_in), 1/sqrt(fan_in)))
# ----------------------------------------------------------------------------
def _conv_init(key, cin, cout, ksize):
    kw, kb = jax.random.split(key)
    fan_in = cin * ksize * ksize
    scale = 1.0 / (fan_in ** 0.5)
    if ksize == 1:
        wgt = jax.random.uniform(kw, (cin, cout), jnp.float32, -scale, scale)
    else:
        wgt = jax.random.uniform(kw, (ksize, ksize, cin, cout), jnp.float32, -scale, scale)
    b = jax.random.uniform(kb, (cout,), jnp.float32, -scale, scale)
    return {"w": wgt, "b": b}


def init_params(key, in_channels, out_channels, mid_channels, num_blocks, depth, growth):
    n_keys = 2 + num_blocks * (2 * depth + 1) + 4
    keys = iter(jax.random.split(key, n_keys))
    params = {"in": _conv_init(next(keys), in_channels, mid_channels, 1), "blocks": []}
    for _ in range(num_blocks):
        layers = []
        c = mid_channels
        for _ in range(depth):
            layers.append({"c1": _conv_init(next(keys), c, c, 1),
                           "c3": _conv_init(next(keys), c, growth, 3)})
            c = c + growth
        params["blocks"].append({"layers": layers,
                                 "out": _conv_init(next(keys), c, mid_channels, 1)})
    params["out"] = _conv_init(next(keys), mid_channels, out_channels, 1)
    return params


# ----------------------------------------------------------------------------
# Pure-JAX reference (matches the PyTorch module semantics)
# ----------------------------------------------------------------------------
def context_init_reference(params, x_nchw, u_nchw, *, num_bits, mid_channels, num_blocks, depth):
    x = jnp.transpose(x_nchw, (0, 2, 3, 1))
    u = jnp.transpose(u_nchw, (0, 2, 3, 1))
    z = (x + u) / float(2 ** num_bits) - 0.5

    def c1(xx, w, b, relu):
        y = jnp.einsum("nhwc,co->nhwo", xx, w) + b
        return jnp.maximum(y, 0.0) if relu else y

    def c3(xx, w, b):
        hh, ww = xx.shape[1], xx.shape[2]
        xp = jnp.pad(xx, ((0, 0), (1, 1), (1, 1), (0, 0)))
        y = sum(jnp.einsum("nhwc,co->nhwo", xp[:, dy:dy + hh, dx:dx + ww, :], w[dy, dx])
                for dy in range(3) for dx in range(3)) + b
        return jnp.maximum(y, 0.0)

    if mid_channels > 0 and num_blocks > 0 and depth > 0:
        hcur = c1(z, params["in"]["w"], params["in"]["b"], False)
        for blk in params["blocks"]:
            hb = hcur
            for layer in blk["layers"]:
                t = c1(hb, layer["c1"]["w"], layer["c1"]["b"], True)
                t = c3(t, layer["c3"]["w"], layer["c3"]["b"])
                hb = jnp.concatenate([hb, t], axis=-1)
            hcur = c1(hb, blk["out"]["w"], blk["out"]["b"], False)
        z = c1(hcur, params["out"]["w"], params["out"]["b"], False)
    return jnp.transpose(z, (0, 3, 1, 2))


# ----------------------------------------------------------------------------
if __name__ == "__main__":
    num_bits = 8
    in_channels, out_channels, mid_channels = 3, 8, 8
    num_blocks, depth = 1, 2
    growth = mid_channels
    n, hh, ww = 4, 16, 16          # n=4 -> B_TILE=2, grid=(2,): exercises the batched
                                   # lane path and keeps both v7x TensorCores busy.

    key = jax.random.PRNGKey(0)
    k_x, k_u, k_p = jax.random.split(key, 3)
    x = jax.random.randint(k_x, (n, in_channels, hh, ww), 0, 2 ** num_bits).astype(jnp.float32)
    u = jax.random.uniform(k_u, x.shape, jnp.float32)      # uniform dequant noise
    params = init_params(k_p, in_channels, out_channels, mid_channels, num_blocks, depth, growth)

    fwd = jax.jit(functools.partial(context_init_forward, num_bits=num_bits,
                                    mid_channels=mid_channels, num_blocks=num_blocks,
                                    depth=depth))
    out = jax.block_until_ready(fwd(params, x, u))

    ref = context_init_reference(params, x, u, num_bits=num_bits,
                                 mid_channels=mid_channels, num_blocks=num_blocks, depth=depth)
    assert out.shape == (n, out_channels, hh, ww)
    assert jnp.allclose(out, ref, rtol=1e-4, atol=1e-4)
    print("KERNEL_OK")
</pallas_src>

<mosaic_0001>
module attributes {stable_mosaic.version = 11 : i64} {
  func.func @kernel(%arg0: i32, %arg1: memref<1x3x512xf32, #tpu.memory_space<vmem>>, %arg2: memref<1x3x512xf32, #tpu.memory_space<vmem>>, %arg3: memref<9x512xf32, #tpu.memory_space<vmem>>, %arg4: memref<48x24xf32, #tpu.memory_space<vmem>>, %arg5: memref<16x144xf32, #tpu.memory_space<vmem>>, %arg6: memref<64x1xf32, #tpu.memory_space<vmem>>, %arg7: memref<1x8x512xf32, #tpu.memory_space<vmem>>, %arg8: memref<24x512xf32, #tpu.memory_space<vmem>>, %arg9: memref<144x512xf32, #tpu.memory_space<vmem>>) attributes {dimension_semantics = [#tpu.dimension_semantics<parallel>], iteration_bounds = array<i64: 2>, scalar_prefetch = 0 : i64, scratch_operands = 2 : i64, tpu.core_type = #tpu.core_type<tc>, window_params = [{transform_indices = @transform_0, window_bounds = array<i64: 1, 3, 512>}, {transform_indices = @transform_1, window_bounds = array<i64: 1, 3, 512>}, {pipeline_mode = #tpu.pipeline_mode<synchronous>, transform_indices = @transform_2, window_bounds = array<i64: 9, 512>}, {pipeline_mode = #tpu.pipeline_mode<synchronous>, transform_indices = @transform_3, window_bounds = array<i64: 48, 24>}, {pipeline_mode = #tpu.pipeline_mode<synchronous>, transform_indices = @transform_4, window_bounds = array<i64: 16, 144>}, {pipeline_mode = #tpu.pipeline_mode<synchronous>, transform_indices = @transform_5, window_bounds = array<i64: 64, 1>}, {transform_indices = @transform_6, window_bounds = array<i64: 1, 8, 512>}]} {
    %c0 = arith.constant 0 : index
    %c0_0 = arith.constant 0 : index
    %0 = vector.load %arg3[%c0, %c0_0] : memref<9x512xf32, #tpu.memory_space<vmem>>, vector<9x512xf32>
    %1 = vector.extract_strided_slice %0 {offsets = [0, 0], sizes = [1, 512], strides = [1, 1]} : vector<9x512xf32> to vector<1x512xf32>
    %2 = vector.extract_strided_slice %0 {offsets = [1, 0], sizes = [1, 512], strides = [1, 1]} : vector<9x512xf32> to vector<1x512xf32>
    %3 = vector.extract_strided_slice %0 {offsets = [2, 0], sizes = [1, 512], strides = [1, 1]} : vector<9x512xf32> to vector<1x512xf32>
    %4 = vector.extract_strided_slice %0 {offsets = [3, 0], sizes = [1, 512], strides = [1, 1]} : vector<9x512xf32> to vector<1x512xf32>
    %5 = vector.extract_strided_slice %0 {offsets = [5, 0], sizes = [1, 512], strides = [1, 1]} : vector<9x512xf32> to vector<1x512xf32>
    %6 = vector.extract_strided_slice %0 {offsets = [6, 0], sizes = [1, 512], strides = [1, 1]} : vector<9x512xf32> to vector<1x512xf32>
    %7 = vector.extract_strided_slice %0 {offsets = [7, 0], sizes = [1, 512], strides = [1, 1]} : vector<9x512xf32> to vector<1x512xf32>
    %8 = vector.extract_strided_slice %0 {offsets = [8, 0], sizes = [1, 512], strides = [1, 1]} : vector<9x512xf32> to vector<1x512xf32>
    %c0_1 = arith.constant 0 : index
    %c0_2 = arith.constant 0 : index
    %c0_3 = arith.constant 0 : index
    %9 = vector.load %arg1[%c0_1, %c0_2, %c0_3] : memref<1x3x512xf32, #tpu.memory_space<vmem>>, vector<1x3x512xf32>
    %10 = vector.shape_cast %9 : vector<1x3x512xf32> to vector<3x512xf32>
    %c0_4 = arith.constant 0 : index
    %c0_5 = arith.constant 0 : index
    %c0_6 = arith.constant 0 : index
    %11 = vector.load %arg2[%c0_4, %c0_5, %c0_6] : memref<1x3x512xf32, #tpu.memory_space<vmem>>, vector<1x3x512xf32>
    %12 = vector.shape_cast %11 : vector<1x3x512xf32> to vector<3x512xf32>
    %13 = arith.addf %10, %12 : vector<3x512xf32>
    %c0_7 = arith.constant 0 : index
    %c0_8 = arith.constant 0 : index
    %14 = vector.load %arg4[%c0_7, %c0_8] : memref<48x24xf32, #tpu.memory_space<vmem>>, vector<8x3xf32>
    %cst = arith.constant dense<0.000000e+00> : vector<8x512xf32>
    %15 = tpu.matmul %14, %13, %cst {dimension_numbers = #tpu.dot_dimension_numbers<[1], [0], [0], [1], [0, 0, 1, 1], [], []>} : vector<8x3xf32>, vector<3x512xf32>, vector<8x512xf32> -> vector<8x512xf32>
    %c0_9 = arith.constant 0 : index
    %c0_10 = arith.constant 0 : index
    %16 = vector.load %arg6[%c0_9, %c0_10] : memref<64x1xf32, #tpu.memory_space<vmem>>, vector<8x1xf32>
    %17 = vector.broadcast %16 : vector<8x1xf32> to vector<8x512xf32>
    %18 = arith.addf %15, %17 : vector<8x512xf32>
    %c0_11 = arith.constant 0 : index
    %c0_12 = arith.constant 0 : index
    %19 = vector.load %arg8[%c0_11, %c0_12] : memref<24x512xf32, #tpu.memory_space<vmem>>, vector<8x512xf32>
    tpu.vector_store %arg8[%c0_11, %c0_12], %18 {strides = array<i32>} : memref<24x512xf32, #tpu.memory_space<vmem>>, vector<8x512xf32>,
    %c8 = arith.constant 8 : index
    %c0_13 = arith.constant 0 : index
    %20 = vector.load %arg4[%c8, %c0_13] : memref<48x24xf32, #tpu.memory_space<vmem>>, vector<8x8xf32>
    %c0_14 = arith.constant 0 : index
    %c0_15 = arith.constant 0 : index
    %21 = vector.load %arg8[%c0_14, %c0_15] : memref<24x512xf32, #tpu.memory_space<vmem>>, vector<8x512xf32>
    %cst_16 = arith.constant dense<0.000000e+00> : vector<8x512xf32>
    %22 = tpu.matmul %20, %21, %cst_16 {dimension_numbers = #tpu.dot_dimension_numbers<[1], [0], [0], [1], [0, 0, 1, 1], [], []>} : vector<8x8xf32>, vector<8x512xf32>, vector<8x512xf32> -> vector<8x512xf32>
    %c8_17 = arith.constant 8 : index
    %c0_18 = arith.constant 0 : index
    %23 = vector.load %arg6[%c8_17, %c0_18] : memref<64x1xf32, #tpu.memory_space<vmem>>, vector<8x1xf32>
    %24 = vector.broadcast %23 : vector<8x1xf32> to vector<8x512xf32>
    %25 = arith.addf %22, %24 : vector<8x512xf32>
    %cst_19 = arith.constant 0.000000e+00 : f32
    %26 = vector.broadcast %cst_19 : f32 to vector<8x512xf32>
    %27 = arith.maximumf %25, %26 : vector<8x512xf32>
    %c17_i32 = arith.constant 17 : i32
    %28 = tpu.dynamic_rotate %27 by %c17_i32 dim 1 : vector<8x512xf32>, i32 -> vector<8x512xf32>
    %29 = vector.broadcast %1 : vector<1x512xf32> to vector<8x512xf32>
    %30 = arith.mulf %28, %29 : vector<8x512xf32>
    %c0_20 = arith.constant 0 : index
    %c0_21 = arith.constant 0 : index
    %31 = vector.load %arg9[%c0_20, %c0_21] : memref<144x512xf32, #tpu.memory_space<vmem>>, vector<8x512xf32>
    tpu.vector_store %arg9[%c0_20, %c0_21], %30 {strides = array<i32>} : memref<144x512xf32, #tpu.memory_space<vmem>>, vector<8x512xf32>,
    %c16_i32 = arith.constant 16 : i32
    %32 = tpu.dynamic_rotate %27 by %c16_i32 dim 1 : vector<8x512xf32>, i32 -> vector<8x512xf32>
    %33 = vector.broadcast %2 : vector<1x512xf32> to vector<8x512xf32>
    %34 = arith.mulf %32, %33 : vector<8x512xf32>
    %c8_22 = arith.constant 8 : index
    %c0_23 = arith.constant 0 : index
    %35 = vector.load %arg9[%c8_22, %c0_23] : memref<144x512xf32, #tpu.memory_space<vmem>>, vector<8x512xf32>
    tpu.vector_store %arg9[%c8_22, %c0_23], %34 {strides = array<i32>} : memref<144x512xf32, #tpu.memory_space<vmem>>, vector<8x512xf32>,
    %c15_i32 = arith.constant 15 : i32
    %36 = tpu.dynamic_rotate %27 by %c15_i32 dim 1 : vector<8x512xf32>, i32 -> vector<8x512xf32>
    %37 = vector.broadcast %3 : vector<1x512xf32> to vector<8x512xf32>
    %38 = arith.mulf %36, %37 : vector<8x512xf32>
    %c16 = arith.constant 16 : index
    %c0_24 = arith.constant 0 : index
    %39 = vector.load %arg9[%c16, %c0_24] : memref<144x512xf32, #tpu.memory_space<vmem>>, vector<8x512xf32>
    tpu.vector_store %arg9[%c16, %c0_24], %38 {strides = array<i32>} : memref<144x512xf32, #tpu.memory_space<vmem>>, vector<8x512xf32>,
    %c1_i32 = arith.constant 1 : i32
    %40 = tpu.dynamic_rotate %27 by %c1_i32 dim 1 : vector<8x512xf32>, i32 -> vector<8x512xf32>
    %41 = vector.broadcast %4 : vector<1x512xf32> to vector<8x512xf32>
    %42 = arith.mulf %40, %41 : vector<8x512xf32>
    %c24 = arith.constant 24 : index
    %c0_25 = arith.constant 0 : index
    %43 = vector.load %arg9[%c24, %c0_25] : memref<144x512xf32, #tpu.memory_space<vmem>>, vector<8x512xf32>
    tpu.vector_store %arg9[%c24, %c0_25], %42 {strides = array<i32>} : memref<144x512xf32, #tpu.memory_space<vmem>>, vector<8x512xf32>,
    %c32 = arith.constant 32 : index
    %c0_26 = arith.constant 0 : index
    %44 = vector.load %arg9[%c32, %c0_26] : memref<144x512xf32, #tpu.memory_space<vmem>>, vector<8x512xf32>
    tpu.vector_store %arg9[%c32, %c0_26], %27 {strides = array<i32>} : memref<144x512xf32, #tpu.memory_space<vmem>>, vector<8x512xf32>,
    %c511_i32 = arith.constant 511 : i32
    %45 = tpu.dynamic_rotate %27 by %c511_i32 dim 1 : vector<8x512xf32>, i32 -> vector<8x512xf32>
    %46 = vector.broadcast %5 : vector<1x512xf32> to vector<8x512xf32>
    %47 = arith.mulf %45, %46 : vector<8x512xf32>
    %c40 = arith.constant 40 : index
    %c0_27 = arith.constant 0 : index
    %48 = vector.load %arg9[%c40, %c0_27] : memref<144x512xf32, #tpu.memory_space<vmem>>, vector<8x512xf32>
    tpu.vector_store %arg9[%c40, %c0_27], %47 {strides = array<i32>} : memref<144x512xf32, #tpu.memory_space<vmem>>, vector<8x512xf32>,
    %c497_i32 = arith.constant 497 : i32
    %49 = tpu.dynamic_rotate %27 by %c497_i32 dim 1 : vector<8x512xf32>, i32 -> vector<8x512xf32>
    %50 = vector.broadcast %6 : vector<1x512xf32> to vector<8x512xf32>
    %51 = arith.mulf %49, %50 : vector<8x512xf32>
    %c48 = arith.constant 48 : index
    %c0_28 = arith.constant 0 : index
    %52 = vector.load %arg9[%c48, %c0_28] : memref<144x512xf32, #tpu.memory_space<vmem>>, vector<8x512xf32>
    tpu.vector_store %arg9[%c48, %c0_28], %51 {strides = array<i32>} : memref<144x512xf32, #tpu.memory_space<vmem>>, vector<8x512xf32>,
    %c496_i32 = arith.constant 496 : i32
    %53 = tpu.dynamic_rotate %27 by %c496_i32 dim 1 : vector<8x512xf32>, i32 -> vector<8x512xf32>
    %54 = vector.broadcast %7 : vector<1x512xf32> to vector<8x512xf32>
    %55 = arith.mulf %53, %54 : vector<8x512xf32>
    %c56 = arith.constant 56 : index
    %c0_29 = arith.constant 0 : index
    %56 = vector.load %arg9[%c56, %c0_29] : memref<144x512xf32, #tpu.memory_space<vmem>>, vector<8x512xf32>
    tpu.vector_store %arg9[%c56, %c0_29], %55 {strides = array<i32>} : memref<144x512xf32, #tpu.memory_space<vmem>>, vector<8x512xf32>,
    %c495_i32 = arith.constant 495 : i32
    %57 = tpu.dynamic_rotate %27 by %c495_i32 dim 1 : vector<8x512xf32>, i32 -> vector<8x512xf32>
    %58 = vector.broadcast %8 : vector<1x512xf32> to vector<8x512xf32>
    %59 = arith.mulf %57, %58 : vector<8x512xf32>
    %c64 = arith.constant 64 : index
    %c0_30 = arith.constant 0 : index
    %60 = vector.load %arg9[%c64, %c0_30] : memref<144x512xf32, #tpu.memory_space<vmem>>, vector<8x512xf32>
    tpu.vector_store %arg9[%c64, %c0_30], %59 {strides = array<i32>} : memref<144x512xf32, #tpu.memory_space<vmem>>, vector<8x512xf32>,
    %c0_31 = arith.constant 0 : index
    %c0_32 = arith.constant 0 : index
    %61 = vector.load %arg5[%c0_31, %c0_32] : memref<16x144xf32, #tpu.memory_space<vmem>>, vector<8x72xf32>
    %c0_33 = arith.constant 0 : index
    %c0_34 = arith.constant 0 : index
    %62 = vector.load %arg9[%c0_33, %c0_34] : memref<144x512xf32, #tpu.memory_space<vmem>>, vector<72x512xf32>
    %cst_35 = arith.constant dense<0.000000e+00> : vector<8x512xf32>
    %63 = tpu.matmul %61, %62, %cst_35 {dimension_numbers = #tpu.dot_dimension_numbers<[1], [0], [0], [1], [0, 0, 1, 1], [], []>} : vector<8x72xf32>, vector<72x512xf32>, vector<8x512xf32> -> vector<8x512xf32>
    %c16_36 = arith.constant 16 : index
    %c0_37 = arith.constant 0 : index
    %64 = vector.load %arg6[%c16_36, %c0_37] : memref<64x1xf32, #tpu.memory_space<vmem>>, vector<8x1xf32>
    %65 = vector.broadcast %64 : vector<8x1xf32> to vector<8x512xf32>
    %66 = arith.addf %63, %65 : vector<8x512xf32>
    %cst_38 = arith.constant 0.000000e+00 : f32
    %67 = vector.broadcast %cst_38 : f32 to vector<8x512xf32>
    %68 = arith.maximumf %66, %67 : vector<8x512xf32>
    %c8_39 = arith.constant 8 : index
    %c0_40 = arith.constant 0 : index
    %69 = vector.load %arg8[%c8_39, %c0_40] : memref<24x512xf32, #tpu.memory_space<vmem>>, vector<8x512xf32>
    tpu.vector_store %arg8[%c8_39, %c0_40], %68 {strides = array<i32>} : memref<24x512xf32, #tpu.memory_space<vmem>>, vector<8x512xf32>,
    %c16_41 = arith.constant 16 : index
    %c0_42 = arith.constant 0 : index
    %70 = vector.load %arg4[%c16_41, %c0_42] : memref<48x24xf32, #tpu.memory_space<vmem>>, vector<16x16xf32>
    %c0_43 = arith.constant 0 : index
    %c0_44 = arith.constant 0 : index
    %71 = vector.load %arg8[%c0_43, %c0_44] : memref<24x512xf32, #tpu.memory_space<vmem>>, vector<16x512xf32>
    %cst_45 = arith.constant dense<0.000000e+00> : vector<16x512xf32>
    %72 = tpu.matmul %70, %71, %cst_45 {dimension_numbers = #tpu.dot_dimension_numbers<[1], [0], [0], [1], [0, 0, 1, 1], [], []>} : vector<16x16xf32>, vector<16x512xf32>, vector<16x512xf32> -> vector<16x512xf32>
    %c24_46 = arith.constant 24 : index
    %c0_47 = arith.constant 0 : index
    %73 = vector.load %arg6[%c24_46, %c0_47] : memref<64x1xf32, #tpu.memory_space<vmem>>, vector<16x1xf32>
    %74 = vector.broadcast %73 : vector<16x1xf32> to vector<16x512xf32>
    %75 = arith.addf %72, %74 : vector<16x512xf32>
    %cst_48 = arith.constant 0.000000e+00 : f32
    %76 = vector.broadcast %cst_48 : f32 to vector<16x512xf32>
    %77 = arith.maximumf %75, %76 : vector<16x512xf32>
    %c17_i32_49 = arith.constant 17 : i32
    %78 = tpu.dynamic_rotate %77 by %c17_i32_49 dim 1 : vector<16x512xf32>, i32 -> vector<16x512xf32>
    %79 = vector.broadcast %1 : vector<1x512xf32> to vector<16x512xf32>
    %80 = arith.mulf %78, %79 : vector<16x512xf32>
    %c0_50 = arith.constant 0 : index
    %c0_51 = arith.constant 0 : index
    %81 = vector.load %arg9[%c0_50, %c0_51] : memref<144x512xf32, #tpu.memory_space<vmem>>, vector<16x512xf32>
    tpu.vector_store %arg9[%c0_50, %c0_51], %80 {strides = array<i32>} : memref<144x512xf32, #tpu.memory_space<vmem>>, vector<16x512xf32>,
    %c16_i32_52 = arith.constant 16 : i32
    %82 = tpu.dynamic_rotate %77 by %c16_i32_52 dim 1 : vector<16x512xf32>, i32 -> vector<16x512xf32>
    %83 = vector.broadcast %2 : vector<1x512xf32> to vector<16x512xf32>
    %84 = arith.mulf %82, %83 : vector<16x512xf32>
    %c16_53 = arith.constant 16 : index
    %c0_54 = arith.constant 0 : index
    %85 = vector.load %arg9[%c16_53, %c0_54] : memref<144x512xf32, #tpu.memory_space<vmem>>, vector<16x512xf32>
    tpu.vector_store %arg9[%c16_53, %c0_54], %84 {strides = array<i32>} : memref<144x512xf32, #tpu.memory_space<vmem>>, vector<16x512xf32>,
    %c15_i32_55 = arith.constant 15 : i32
    %86 = tpu.dynamic_rotate %77 by %c15_i32_55 dim 1 : vector<16x512xf32>, i32 -> vector<16x512xf32>
    %87 = vector.broadcast %3 : vector<1x512xf32> to vector<16x512xf32>
    %88 = arith.mulf %86, %87 : vector<16x512xf32>
    %c32_56 = arith.constant 32 : index
    %c0_57 = arith.constant 0 : index
    %89 = vector.load %arg9[%c32_56, %c0_57] : memref<144x512xf32, #tpu.memory_space<vmem>>, vector<16x512xf32>
    tpu.vector_store %arg9[%c32_56, %c0_57], %88 {strides = array<i32>} : memref<144x512xf32, #tpu.memory_space<vmem>>, vector<16x512xf32>,
    %c1_i32_58 = arith.constant 1 : i32
    %90 = tpu.dynamic_rotate %77 by %c1_i32_58 dim 1 : vector<16x512xf32>, i32 -> vector<16x512xf32>
    %91 = vector.broadcast %4 : vector<1x512xf32> to vector<16x512xf32>
    %92 = arith.mulf %90, %91 : vector<16x512xf32>
    %c48_59 = arith.constant 48 : index
    %c0_60 = arith.constant 0 : index
    %93 = vector.load %arg9[%c48_59, %c0_60] : memref<144x512xf32, #tpu.memory_space<vmem>>, vector<16x512xf32>
    tpu.vector_store %arg9[%c48_59, %c0_60], %92 {strides = array<i32>} : memref<144x512xf32, #tpu.memory_space<vmem>>, vector<16x512xf32>,
    %c64_61 = arith.constant 64 : index
    %c0_62 = arith.constant 0 : index
    %94 = vector.load %arg9[%c64_61, %c0_62] : memref<144x512xf32, #tpu.memory_space<vmem>>, vector<16x512xf32>
    tpu.vector_store %arg9[%c64_61, %c0_62], %77 {strides = array<i32>} : memref<144x512xf32, #tpu.memory_space<vmem>>, vector<16x512xf32>,
    %c511_i32_63 = arith.constant 511 : i32
    %95 = tpu.dynamic_rotate %77 by %c511_i32_63 dim 1 : vector<16x512xf32>, i32 -> vector<16x512xf32>
    %96 = vector.broadcast %5 : vector<1x512xf32> to vector<16x512xf32>
    %97 = arith.mulf %95, %96 : vector<16x512xf32>
    %c80 = arith.constant 80 : index
    %c0_64 = arith.constant 0 : index
    %98 = vector.load %arg9[%c80, %c0_64] : memref<144x512xf32, #tpu.memory_space<vmem>>, vector<16x512xf32>
    tpu.vector_store %arg9[%c80, %c0_64], %97 {strides = array<i32>} : memref<144x512xf32, #tpu.memory_space<vmem>>, vector<16x512xf32>,
    %c497_i32_65 = arith.constant 497 : i32
    %99 = tpu.dynamic_rotate %77 by %c497_i32_65 dim 1 : vector<16x512xf32>, i32 -> vector<16x512xf32>
    %100 = vector.broadcast %6 : vector<1x512xf32> to vector<16x512xf32>
    %101 = arith.mulf %99, %100 : vector<16x512xf32>
    %c96 = arith.constant 96 : index
    %c0_66 = arith.constant 0 : index
    %102 = vector.load %arg9[%c96, %c0_66] : memref<144x512xf32, #tpu.memory_space<vmem>>, vector<16x512xf32>
    tpu.vector_store %arg9[%c96, %c0_66], %101 {strides = array<i32>} : memref<144x512xf32, #tpu.memory_space<vmem>>, vector<16x512xf32>,
    %c496_i32_67 = arith.constant 496 : i32
    %103 = tpu.dynamic_rotate %77 by %c496_i32_67 dim 1 : vector<16x512xf32>, i32 -> vector<16x512xf32>
    %104 = vector.broadcast %7 : vector<1x512xf32> to vector<16x512xf32>
    %105 = arith.mulf %103, %104 : vector<16x512xf32>
    %c112 = arith.constant 112 : index
    %c0_68 = arith.constant 0 : index
    %106 = vector.load %arg9[%c112, %c0_68] : memref<144x512xf32, #tpu.memory_space<vmem>>, vector<16x512xf32>
    tpu.vector_store %arg9[%c112, %c0_68], %105 {strides = array<i32>} : memref<144x512xf32, #tpu.memory_space<vmem>>, vector<16x512xf32>,
    %c495_i32_69 = arith.constant 495 : i32
    %107 = tpu.dynamic_rotate %77 by %c495_i32_69 dim 1 : vector<16x512xf32>, i32 -> vector<16x512xf32>
    %108 = vector.broadcast %8 : vector<1x512xf32> to vector<16x512xf32>
    %109 = arith.mulf %107, %108 : vector<16x512xf32>
    %c128 = arith.constant 128 : index
    %c0_70 = arith.constant 0 : index
    %110 = vector.load %arg9[%c128, %c0_70] : memref<144x512xf32, #tpu.memory_space<vmem>>, vector<16x512xf32>
    tpu.vector_store %arg9[%c128, %c0_70], %109 {strides = array<i32>} : memref<144x512xf32, #tpu.memory_space<vmem>>, vector<16x512xf32>,
    %c8_71 = arith.constant 8 : index
    %c0_72 = arith.constant 0 : index
    %111 = vector.load %arg5[%c8_71, %c0_72] : memref<16x144xf32, #tpu.memory_space<vmem>>, vector<8x144xf32>
    %c0_73 = arith.constant 0 : index
    %c0_74 = arith.constant 0 : index
    %112 = vector.load %arg9[%c0_73, %c0_74] : memref<144x512xf32, #tpu.memory_space<vmem>>, vector<144x512xf32>
    %cst_75 = arith.constant dense<0.000000e+00> : vector<8x512xf32>
    %113 = tpu.matmul %111, %112, %cst_75 {dimension_numbers = #tpu.dot_dimension_numbers<[1], [0], [0], [1], [0, 0, 1, 1], [], []>} : vector<8x144xf32>, vector<144x512xf32>, vector<8x512xf32> -> vector<8x512xf32>
    %c40_76 = arith.constant 40 : index
    %c0_77 = arith.constant 0 : index
    %114 = vector.load %arg6[%c40_76, %c0_77] : memref<64x1xf32, #tpu.memory_space<vmem>>, vector<8x1xf32>
    %115 = vector.broadcast %114 : vector<8x1xf32> to vector<8x512xf32>
    %116 = arith.addf %113, %115 : vector<8x512xf32>
    %cst_78 = arith.constant 0.000000e+00 : f32
    %117 = vector.broadcast %cst_78 : f32 to vector<8x512xf32>
    %118 = arith.maximumf %116, %117 : vector<8x512xf32>
    %c16_79 = arith.constant 16 : index
    %c0_80 = arith.constant 0 : index
    %119 = vector.load %arg8[%c16_79, %c0_80] : memref<24x512xf32, #tpu.memory_space<vmem>>, vector<8x512xf32>
    tpu.vector_store %arg8[%c16_79, %c0_80], %118 {strides = array<i32>} : memref<24x512xf32, #tpu.memory_space<vmem>>, vector<8x512xf32>,
    %c32_81 = arith.constant 32 : index
    %c0_82 = arith.constant 0 : index
    %120 = vector.load %arg4[%c32_81, %c0_82] : memref<48x24xf32, #tpu.memory_space<vmem>>, vector<8x24xf32>
    %c0_83 = arith.constant 0 : index
    %c0_84 = arith.constant 0 : index
    %121 = vector.load %arg8[%c0_83, %c0_84] : memref<24x512xf32, #tpu.memory_space<vmem>>, vector<24x512xf32>
    %cst_85 = arith.constant dense<0.000000e+00> : vector<8x512xf32>
    %122 = tpu.matmul %120, %121, %cst_85 {dimension_numbers = #tpu.dot_dimension_numbers<[1], [0], [0], [1], [0, 0, 1, 1], [], []>} : vector<8x24xf32>, vector<24x512xf32>, vector<8x512xf32> -> vector<8x512xf32>
    %c48_86 = arith.constant 48 : index
    %c0_87 = arith.constant 0 : index
    %123 = vector.load %arg6[%c48_86, %c0_87] : memref<64x1xf32, #tpu.memory_space<vmem>>, vector<8x1xf32>
    %124 = vector.broadcast %123 : vector<8x1xf32> to vector<8x512xf32>
    %125 = arith.addf %122, %124 : vector<8x512xf32>
    %c40_88 = arith.constant 40 : index
    %c0_89 = arith.constant 0 : index
    %126 = vector.load %arg4[%c40_88, %c0_89] : memref<48x24xf32, #tpu.memory_space<vmem>>, vector<8x8xf32>
    %cst_90 = arith.constant dense<0.000000e+00> : vector<8x512xf32>
    %127 = tpu.matmul %126, %125, %cst_90 {dimension_numbers = #tpu.dot_dimension_numbers<[1], [0], [0], [1], [0, 0, 1, 1], [], []>} : vector<8x8xf32>, vector<8x512xf32>, vector<8x512xf32> -> vector<8x512xf32>
    %c56_91 = arith.constant 56 : index
    %c0_92 = arith.constant 0 : index
    %128 = vector.load %arg6[%c56_91, %c0_92] : memref<64x1xf32, #tpu.memory_space<vmem>>, vector<8x1xf32>
    %129 = vector.broadcast %128 : vector<8x1xf32> to vector<8x512xf32>
    %130 = arith.addf %127, %129 : vector<8x512xf32>
    %c0_93 = arith.constant 0 : index
    %c0_94 = arith.constant 0 : index
    %c0_95 = arith.constant 0 : index
    %131 = vector.load %arg7[%c0_93, %c0_94, %c0_95] : memref<1x8x512xf32, #tpu.memory_space<vmem>>, vector<1x8x512xf32>
    %132 = vector.shape_cast %131 : vector<1x8x512xf32> to vector<8x512xf32>
    %133 = vector.shape_cast %130 : vector<8x512xf32> to vector<1x8x512xf32>
    tpu.vector_store %arg7[%c0_93, %c0_94, %c0_95], %133 {strides = array<i32>} : memref<1x8x512xf32, #tpu.memory_space<vmem>>, vector<1x8x512xf32>,
    return
  }
  func.func @transform_0(%arg0: i32) -> (i32, i32, i32) {
    %c0_i32 = arith.constant 0 : i32
    %c0_i32_0 = arith.constant 0 : i32
    %c0_i32_1 = arith.constant 0 : i32
    return %arg0, %c0_i32, %c0_i32_0 : i32, i32, i32
  }
  func.func @transform_1(%arg0: i32) -> (i32, i32, i32) {
    %c0_i32 = arith.constant 0 : i32
    %c0_i32_0 = arith.constant 0 : i32
    %c0_i32_1 = arith.constant 0 : i32
    return %arg0, %c0_i32, %c0_i32_0 : i32, i32, i32
  }
  func.func @transform_2(%arg0: i32) -> (i32, i32) {
    %c0_i32 = arith.constant 0 : i32
    %c0_i32_0 = arith.constant 0 : i32
    %c0_i32_1 = arith.constant 0 : i32
    return %c0_i32, %c0_i32_0 : i32, i32
  }
  func.func @transform_3(%arg0: i32) -> (i32, i32) {
    %c0_i32 = arith.constant 0 : i32
    %c0_i32_0 = arith.constant 0 : i32
    %c0_i32_1 = arith.constant 0 : i32
    return %c0_i32, %c0_i32_0 : i32, i32
  }
  func.func @transform_4(%arg0: i32) -> (i32, i32) {
    %c0_i32 = arith.constant 0 : i32
    %c0_i32_0 = arith.constant 0 : i32
    %c0_i32_1 = arith.constant 0 : i32
    return %c0_i32, %c0_i32_0 : i32, i32
  }
  func.func @transform_5(%arg0: i32) -> (i32, i32) {
    %c0_i32 = arith.constant 0 : i32
    %c0_i32_0 = arith.constant 0 : i32
    %c0_i32_1 = arith.constant 0 : i32
    return %c0_i32, %c0_i32_0 : i32, i32
  }
  func.func @transform_6(%arg0: i32) -> (i32, i32, i32) {
    %c0_i32 = arith.constant 0 : i32
    %c0_i32_0 = arith.constant 0 : i32
    %c0_i32_1 = arith.constant 0 : i32
    return %arg0, %c0_i32, %c0_i32_0 : i32, i32, i32
  }
}

</mosaic_0001>

<llo_original>
// kernel: context_init_forward.1
$region0: #{context_init_forward.1}
  #allocation0 [shape = 'u32[]', space=smem, size = 0x4, offset = 0x4, fixed_abs, tag = 'smem constant byte address 0x4 - core index']
  #allocation1 [shape = 'u32[144,128]{1,0:T(1,128)}', space=vmem, size = 0x12000, scoped, tag = 'internal scratch']
  #allocation2 [shape = 'f32[24,512]{1,0:T(8,128)}', space=vmem, size = 0xc000, scoped, tag = 'scratch operand']
  #allocation3 [shape = 'f32[144,512]{1,0:T(8,128)}', space=vmem, size = 0x48000, scoped, tag = 'scratch operand']
  %s0 = inlined_call_operand.vmem [shape: f32[2,3,512], index: 0, kind: input, shape index: {}]
  %s1 = inlined_call_operand.vmem [shape: f32[2,3,512], index: 1, kind: input, shape index: {}]
  %s2 = inlined_call_operand.vmem [shape: f32[9,512], index: 2, kind: input, shape index: {}]
  %s3 = inlined_call_operand.vmem [shape: f32[48,24], index: 3, kind: input, shape index: {}]
  %s4 = inlined_call_operand.vmem [shape: f32[16,144], index: 4, kind: input, shape index: {}]
  %s5 = inlined_call_operand.vmem [shape: f32[64,1], index: 5, kind: input, shape index: {}]
  %s6 = inlined_call_operand.vmem [shape: f32[2,8,512], index: 6, kind: output, shape index: {}]
  %s7 = sld [smem:[#allocation0]]
  $region57: #{context_init_forward.1} parent=0
    _
  %s9 = ssub.s32 1, %s7
  %s10 = scalar_select 0, %s9, %s7
  loop: start=0, step=1, limit=4
  $region2: #{context_init_forward.1} parent=0 // loop_pre_header
    _
  $region3: #{context_init_forward.1} parent=0 // loop_header
    %s12 = sphi 0, %s16
    %p13 = scmp.ge.s32.totalorder %s12, 4
    %s22 = sphi 0, %s24
    %s25 = sphi 0, %s22
    %s26 = sphi 0, %s25
    %s42 = sphi 0, %s26
    %s48 = sphi 0, %s50
    %s51 = sphi 0, %s48
    %s52 = sphi 0, %s51
    %s68 = sphi 0, %s52
    %s72 = sphi 0, %s72
    %s74 = sphi 0, %s72
    %s75 = sphi 0, %s74
    %s89 = sphi 0, %s75
    %s93 = sphi 0, %s93
    %s95 = sphi 0, %s93
    %s96 = sphi 0, %s95
    %s110 = sphi 0, %s96
    %s114 = sphi 0, %s114
    %s116 = sphi 0, %s114
    %s117 = sphi 0, %s116
    %s131 = sphi 0, %s117
    %s135 = sphi 0, %s135
    %s137 = sphi 0, %s135
    %s138 = sphi 0, %s137
    %s152 = sphi 0, %s138
    %s158 = sphi 0, %s160
    %s161 = sphi 0, %s158
    %s162 = sphi 0, %s161
    %s178 = sphi 0, %s162
  $region4: #{context_init_forward.1} parent=0 // loop_header_branch
    %15 = sbr.rel (%p13) target = $region8
  $region5: #{context_init_forward.1} parent=0 // loop_body
    %s17 = ssub.s32 %s12, 1
    %s18 = ssub.s32 %s12, 2
    %s19 = sadd.s32 %s12, 1
    %s20 = ssub.s32 %s12, %s19
    %p21 = scmp.eq.s32.totalorder %s20, 0
    %s23 = sadd.s32 %s22, 1
    %s24 = scalar_select %p21, %s22, %s23
    %p27 = pneg %p21
    %p28 = scmp.eq.s32.totalorder %s12, 1
    %p29 = por %p27, %p28
    %p30 = scmp.ne.s32.totalorder %s22, %s25
    %p31 = scmp.eq.s32.totalorder %s12, 0
    %p32 = por %p30, %p31
    %p33 = scmp.ne.s32.totalorder %s22, %s25
    %p34 = scmp.eq.s32.totalorder %s17, 1
    %p35 = por %p33, %p34
    %p36 = scmp.ne.s32.totalorder %s25, %s26
    %p37 = scmp.eq.s32.totalorder %s17, 0
    %p38 = por %p36, %p37
    %p39 = scmp.ne.s32.totalorder %s25, %s26
    %p40 = scmp.eq.s32.totalorder %s18, 1
    %p41 = por %p39, %p40
    %p43 = scmp.ne.s32.totalorder %s26, %s42
    %p44 = scmp.eq.s32.totalorder %s18, 0
    %p45 = por %p43, %p44
    %s46 = ssub.s32 %s12, %s19
    %p47 = scmp.eq.s32.totalorder %s46, 0
    %s49 = sadd.s32 %s48, 1
    %s50 = scalar_select %p47, %s48, %s49
    %p53 = pneg %p47
    %p54 = scmp.eq.s32.totalorder %s12, 1
    %p55 = por %p53, %p54
    %p56 = scmp.ne.s32.totalorder %s48, %s51
    %p57 = scmp.eq.s32.totalorder %s12, 0
    %p58 = por %p56, %p57
    %p59 = scmp.ne.s32.totalorder %s48, %s51
    %p60 = scmp.eq.s32.totalorder %s17, 1
    %p61 = por %p59, %p60
    %p62 = scmp.ne.s32.totalorder %s51, %s52
    %p63 = scmp.eq.s32.totalorder %s17, 0
    %p64 = por %p62, %p63
    %p65 = scmp.ne.s32.totalorder %s51, %s52
    %p66 = scmp.eq.s32.totalorder %s18, 1
    %p67 = por %p65, %p66
    %p69 = scmp.ne.s32.totalorder %s52, %s68
    %p70 = scmp.eq.s32.totalorder %s18, 0
    %p71 = por %p69, %p70
    %s73 = sadd.s32 %s72, 1
    %p76 = scmp.eq.s32.totalorder %s12, 1
    %p77 = scmp.ne.s32.totalorder %s72, %s74
    %p78 = scmp.eq.s32.totalorder %s12, 0
    %p79 = por %p77, %p78
    %p80 = scmp.ne.s32.totalorder %s72, %s74
    %p81 = scmp.eq.s32.totalorder %s17, 1
    %p82 = por %p80, %p81
    %p83 = scmp.ne.s32.totalorder %s74, %s75
    %p84 = scmp.eq.s32.totalorder %s17, 0
    %p85 = por %p83, %p84
    %p86 = scmp.ne.s32.totalorder %s74, %s75
    %p87 = scmp.eq.s32.totalorder %s18, 1
    %p88 = por %p86, %p87
    %p90 = scmp.ne.s32.totalorder %s75, %s89
    %p91 = scmp.eq.s32.totalorder %s18, 0
    %p92 = por %p90, %p91
    %s94 = sadd.s32 %s93, 1
    %p97 = scmp.eq.s32.totalorder %s12, 1
    %p98 = scmp.ne.s32.totalorder %s93, %s95
    %p99 = scmp.eq.s32.totalorder %s12, 0
    %p100 = por %p98, %p99
    %p101 = scmp.ne.s32.totalorder %s93, %s95
    %p102 = scmp.eq.s32.totalorder %s17, 1
    %p103 = por %p101, %p102
    %p104 = scmp.ne.s32.totalorder %s95, %s96
    %p105 = scmp.eq.s32.totalorder %s17, 0
    %p106 = por %p104, %p105
    %p107 = scmp.ne.s32.totalorder %s95, %s96
    %p108 = scmp.eq.s32.totalorder %s18, 1
    %p109 = por %p107, %p108
    %p111 = scmp.ne.s32.totalorder %s96, %s110
    %p112 = scmp.eq.s32.totalorder %s18, 0
    %p113 = por %p111, %p112
    %s115 = sadd.s32 %s114, 1
    %p118 = scmp.eq.s32.totalorder %s12, 1
    %p119 = scmp.ne.s32.totalorder %s114, %s116
    %p120 = scmp.eq.s32.totalorder %s12, 0
    %p121 = por %p119, %p120
    %p122 = scmp.ne.s32.totalorder %s114, %s116
    %p123 = scmp.eq.s32.totalorder %s17, 1
    %p124 = por %p122, %p123
    %p125 = scmp.ne.s32.totalorder %s116, %s117
    %p126 = scmp.eq.s32.totalorder %s17, 0
    %p127 = por %p125, %p126
    %p128 = scmp.ne.s32.totalorder %s116, %s117
    %p129 = scmp.eq.s32.totalorder %s18, 1
    %p130 = por %p128, %p129
    %p132 = scmp.ne.s32.totalorder %s117, %s131
    %p133 = scmp.eq.s32.totalorder %s18, 0
    %p134 = por %p132, %p133
    %s136 = sadd.s32 %s135, 1
    %p139 = scmp.eq.s32.totalorder %s12, 1
    %p140 = scmp.ne.s32.totalorder %s135, %s137
    %p141 = scmp.eq.s32.totalorder %s12, 0
    %p142 = por %p140, %p141
    %p143 = scmp.ne.s32.totalorder %s135, %s137
    %p144 = scmp.eq.s32.totalorder %s17, 1
    %p145 = por %p143, %p144
    %p146 = scmp.ne.s32.totalorder %s137, %s138
    %p147 = scmp.eq.s32.totalorder %s17, 0
    %p148 = por %p146, %p147
    %p149 = scmp.ne.s32.totalorder %s137, %s138
    %p150 = scmp.eq.s32.totalorder %s18, 1
    %p151 = por %p149, %p150
    %p153 = scmp.ne.s32.totalorder %s138, %s152
    %p154 = scmp.eq.s32.totalorder %s18, 0
    %p155 = por %p153, %p154
    %s156 = ssub.s32 %s12, %s19
    %p157 = scmp.eq.s32.totalorder %s156, 0
    %s159 = sadd.s32 %s158, 1
    %s160 = scalar_select %p157, %s158, %s159
    %p163 = pneg %p157
    %p164 = scmp.eq.s32.totalorder %s12, 1
    %p165 = por %p163, %p164
    %p166 = scmp.ne.s32.totalorder %s158, %s161
    %p167 = scmp.eq.s32.totalorder %s12, 0
    %p168 = por %p166, %p167
    %p169 = scmp.ne.s32.totalorder %s158, %s161
    %p170 = scmp.eq.s32.totalorder %s17, 1
    %p171 = por %p169, %p170
    %p172 = scmp.ne.s32.totalorder %s161, %s162
    %p173 = scmp.eq.s32.totalorder %s17, 0
    %p174 = por %p172, %p173
    %p175 = scmp.ne.s32.totalorder %s161, %s162
    %p176 = scmp.eq.s32.totalorder %s18, 1
    %p177 = por %p175, %p176
    %p179 = scmp.ne.s32.totalorder %s162, %s178
    %p180 = scmp.eq.s32.totalorder %s18, 0
    %p181 = por %p179, %p180
    %p182 = scmp.le.s32.totalorder 1, %s12
    %p183 = scmp.lt.s32.totalorder %s12, 3
    %p184 = pnand %p182, %p183
    %p185 = pneg %p184
    // Predicated region
    $region9: #{context_init_forward.1} parent=5 // pred_check
      _
    $region10: #{context_init_forward.1} parent=5 // pred_check_branch
      %187 = sbr.rel (%p184) target = $region12
    $region11: #{context_init_forward.1} parent=5 // pred_region
      %s188 = ssub.s32 %s12, 1
      // Predicated region
      $region13: #{context_init_forward.1} parent=11 // pred_check
        %p189 = pneg %p85
      $region14: #{context_init_forward.1} parent=11 // pred_check_branch
        %191 = sbr.rel (%p189) target = $region16
      $region15: #{context_init_forward.1} parent=11 // pred_region
        _
      $region16: #{context_init_forward.1} parent=11 // pred_fallthru
        _
      // Predicated region
      $region17: #{context_init_forward.1} parent=11 // pred_check
        %p192 = pneg %p106
      $region18: #{context_init_forward.1} parent=11 // pred_check_branch
        %194 = sbr.rel (%p192) target = $region20
      $region19: #{context_init_forward.1} parent=11 // pred_region
        _
      $region20: #{context_init_forward.1} parent=11 // pred_fallthru
        _
      // Predicated region
      $region21: #{context_init_forward.1} parent=11 // pred_check
        %p195 = pneg %p127
      $region22: #{context_init_forward.1} parent=11 // pred_check_branch
        %197 = sbr.rel (%p195) target = $region24
      $region23: #{context_init_forward.1} parent=11 // pred_region
        _
      $region24: #{context_init_forward.1} parent=11 // pred_fallthru
        _
      // Predicated region
      $region25: #{context_init_forward.1} parent=11 // pred_check
        %p198 = pneg %p148
      $region26: #{context_init_forward.1} parent=11 // pred_check_branch
        %200 = sbr.rel (%p198) target = $region28
      $region27: #{context_init_forward.1} parent=11 // pred_region
        _
      $region28: #{context_init_forward.1} parent=11 // pred_fallthru
        _
    $region12: #{context_init_forward.1} parent=5 // pred_fallthru
      _
    %p201 = scmp.lt.s32.totalorder %s12, 2
    // Predicated region
    $region29: #{context_init_forward.1} parent=5 // pred_check
      %p202 = pneg %p201
    $region30: #{context_init_forward.1} parent=5 // pred_check_branch
      %204 = sbr.rel (%p202) target = $region32
    $region31: #{context_init_forward.1} parent=5 // pred_region
      // Predicated region
      $region33: #{context_init_forward.1} parent=31 // pred_check
        %p205 = pneg %p32
      $region34: #{context_init_forward.1} parent=31 // pred_check_branch
        %207 = sbr.rel (%p205) target = $region36
      $region35: #{context_init_forward.1} parent=31 // pred_region
        %p208 = scmp.lt.s32.totalorder %s12, 1
        %s209 = scalar_select %p208, %s12, 1
        %s210 = smul.addr %s209, 4
        %s211 = smul.addr %s210, 4
        %s212 = scalar_lea.vmem %s0, %s211
      $region36: #{context_init_forward.1} parent=31 // pred_fallthru
        _
      // Predicated region
      $region37: #{context_init_forward.1} parent=31 // pred_check
        %p213 = pneg %p58
      $region38: #{context_init_forward.1} parent=31 // pred_check_branch
        %215 = sbr.rel (%p213) target = $region40
      $region39: #{context_init_forward.1} parent=31 // pred_region
        %p216 = scmp.lt.s32.totalorder %s12, 1
        %s217 = scalar_select %p216, %s12, 1
        %s218 = smul.addr %s217, 4
        %s219 = smul.addr %s218, 4
        %s220 = scalar_lea.vmem %s1, %s219
      $region40: #{context_init_forward.1} parent=31 // pred_fallthru
        _
    $region32: #{context_init_forward.1} parent=5 // pred_fallthru
      _
    %p221 = scmp.le.s32.totalorder 1, %s12
    %p222 = scmp.lt.s32.totalorder %s12, 3
    %p223 = pnand %p221, %p222
    %p224 = pneg %p223
    // Predicated region
    $region41: #{context_init_forward.1} parent=5 // pred_check
      _
    $region42: #{context_init_forward.1} parent=5 // pred_check_branch
      %226 = sbr.rel (%p223) target = $region44
    $region43: #{context_init_forward.1} parent=5 // pred_region
      %s227 = ssub.s32 %s12, 1
      %p228 = scmp.lt.s32.totalorder %s17, 1
      %s229 = scalar_select %p228, %s17, 1
      %s230 = smul.addr %s229, 4
      %s231 = smul.addr %s230, 4
      %s232 = scalar_lea.vmem %s0, %s231
      %p233 = pneg %p38
      %p234 = pneg %p35
      %p235 = scmp.lt.s32.totalorder %s17, 1
      %s236 = scalar_select %p235, %s17, 1
      %s237 = smul.addr %s236, 4
      %s238 = smul.addr %s237, 4
      %s239 = scalar_lea.vmem %s1, %s238
      %p240 = pneg %p64
      %p241 = pneg %p61
      %p242 = pneg %p85
      %p243 = pneg %p82
      %p244 = pneg %p106
      %p245 = pneg %p103
      %p246 = pneg %p127
      %p247 = pneg %p124
      %p248 = pneg %p148
      %p249 = pneg %p145
      %p250 = pneg %p174
      %p251 = pneg %p171
      %p252 = scmp.lt.s32.totalorder %s17, 1
      %s253 = scalar_select %p252, %s17, 1
      %s254 = smul.addr %s253, 4
      %s255 = smul.addr %s254, 8
      %s256 = scalar_lea.vmem %s6, %s255
      %p257 = scmp.lt.s32.totalorder %s17, 1
      %s258 = scalar_select %p257, %s17, 1
      %s259 = smul.addr %s258, 4
      %s260 = smul.addr %s259, 4
      %s261 = scalar_lea.vmem %s0, %s260
      %p262 = scmp.lt.s32.totalorder %s17, 1
      %s263 = scalar_select %p262, %s17, 1
      %s264 = smul.addr %s263, 4
      %s265 = smul.addr %s264, 4
      %s266 = scalar_lea.vmem %s1, %s265
      %p267 = scmp.lt.s32.totalorder %s17, 1
      %s268 = scalar_select %p267, %s17, 1
      %s269 = smul.addr %s268, 4
      %s270 = smul.addr %s269, 8
      %s271 = scalar_lea.vmem %s6, %s270
      %v272 = vld [vmem:[%s2] sm:$0xff]
      %v273 = vld [vmem:[%s2 + $0x8] sm:$0xff]
      %v274 = vld [vmem:[%s2 + $0x10] sm:$0xff]
      %v275 = vld [vmem:[%s2 + $0x18] sm:$0xff]
      %v276 = vld [vmem:[%s2 + $0x20] sm:$0x1]
      %v277 = vld [vmem:[%s2 + $0x28] sm:$0x1]
      %v278 = vld [vmem:[%s2 + $0x30] sm:$0x1]
      %v279 = vld [vmem:[%s2 + $0x38] sm:$0x1]
      %v280 = vld [vmem:[%s261] sm:$0x77]
      %v281 = vld [vmem:[%s261 + $0x8] sm:$0x77]
      %v282 = vld [vmem:[%s266] sm:$0x77]
      %v283 = vld [vmem:[%s266 + $0x8] sm:$0x77]
      %v284 = vadd.f32 %v280, %v282
      %v285 = vadd.f32 %v281, %v283
      %v286 = vld [vmem:[%s3] sm:$0xff]
      %v287 = vld [vmem:[%s5] sm:$0xff]
      %289 = vset.pattern.permute.xlu0 0
      %290 = vperm.xlu0 %289, %v287
      %v291 = vpop.permute.xlu0 %290
      %v295 = vcombine.high %v284, %v284
      %v296 = vcombine.high %v285, %v285
      %vm297 = vcmask 23552
      %v299 = vsel %vm297, %v286, 0
      %vm301 = vcmask 1042432
      %v302 = vsel %vm301, %v284, 0
      %v304 = vsel %vm301, %v295, 0
      %v306 = vsel %vm301, %v285, 0
      %v308 = vsel %vm301, %v296, 0
      %310 = vmatprep.subr.mxu0 %v304
      %311 = vmatpush1.msra.mxu0 %v302
      %312 = vmatprep.subr.mxu0 0.0
      %313 = vmatpush1.msra.mxu0 0.0
      %314 = vmatprep.subr.mxu0 0.0
      %315 = vmatpush1.msra.mxu0 0.0
      %316 = vmatprep.subr.mxu0 0.0
      %317 = vmatpush1.msra.mxu0 0.0
      %318 = vmatprep.subr.mxu0 0.0
      %319 = vmatpush1.msra.mxu0 0.0
      %320 = vmatprep.subr.mxu0 0.0
      %321 = vmatpush1.msra.mxu0 0.0
      %322 = vmatprep.subr.mxu0 0.0
      %323 = vmatpush1.msra.mxu0 0.0
      %324 = vmatprep.subr.mxu0 0.0
      %325 = vmatpush1.msra.mxu0 0.0
      %326 = vmatprep.subr.mxu0 0.0
      %327 = vmatpush1.msra.mxu0 0.0
      %328 = vmatprep.subr.mxu0 0.0
      %329 = vmatpush1.msra.mxu0 0.0
      %330 = vmatprep.subr.mxu0 0.0
      %331 = vmatpush1.msra.mxu0 0.0
      %332 = vmatprep.subr.mxu0 0.0
      %333 = vmatpush1.msra.mxu0 0.0
      %334 = vmatprep.subr.mxu0 0.0
      %335 = vmatpush1.msra.mxu0 0.0
      %336 = vmatprep.subr.mxu0 0.0
      %337 = vmatpush1.msra.mxu0 0.0
      %338 = vmatprep.subr.mxu0 0.0
      %339 = vmatpush1.msra.mxu0 0.0
      %340 = vmatprep.subr.mxu0 0.0
      %341 = vmatpush1.msra.mxu0 0.0
      %342 = vmatprep.subr.mxu0 0.0
      %343 = vmatpush1.msra.mxu0 0.0
      %344 = vmatprep.subr.mxu0 0.0
      %345 = vmatpush1.msra.mxu0 0.0
      %346 = vmatprep.subr.mxu0 0.0
      %347 = vmatpush1.msra.mxu0 0.0
      %348 = vmatprep.subr.mxu0 0.0
      %349 = vmatpush1.msra.mxu0 0.0
      %350 = vmatprep.subr.mxu0 0.0
      %351 = vmatpush1.msra.mxu0 0.0
      %352 = vmatprep.subr.mxu0 0.0
      %353 = vmatpush1.msra.mxu0 0.0
      %354 = vmatprep.subr.mxu0 0.0
      %355 = vmatpush1.msra.mxu0 0.0
      %356 = vmatprep.subr.mxu0 0.0
      %357 = vmatpush1.msra.mxu0 0.0
      %358 = vmatprep.subr.mxu0 0.0
      %359 = vmatpush1.msra.mxu0 0.0
      %360 = vmatprep.subr.mxu0 0.0
      %361 = vmatpush1.msra.mxu0 0.0
      %362 = vmatprep.subr.mxu0 0.0
      %363 = vmatpush1.msra.mxu0 0.0
      %364 = vmatprep.subr.mxu0 0.0
      %365 = vmatpush1.msra.mxu0 0.0
      %366 = vmatprep.subr.mxu0 0.0
      %367 = vmatpush1.msra.mxu0 0.0
      %368 = vmatprep.subr.mxu0 0.0
      %369 = vmatpush1.msra.mxu0 0.0
      %370 = vmatprep.subr.mxu0 0.0
      %371 = vmatpush1.msra.mxu0 0.0
      %372 = vmatprep.subr.mxu0 0.0
      %373 = vmatpush1.msra.mxu0 0.0
      %374 = vmatprep.mubr.f32.mxu0 0.0
      %375 = vmatmul.mubr.f32.gmra.mrb[0].mxu0 %v299
      %v376 = vpop.f32.mrb[0].mxu0
      %v377 = vadd.f32 %v291, %v376
      %v378 = vpop.f32.mrb[0].mxu0
      %v379 = vadd.f32 %v291, %v378
      %380 = vdwg.mxu0
      %381 = vmatprep.subr.mxu0 %v308
      %382 = vmatpush1.msra.mxu0 %v306
      %383 = vmatprep.subr.mxu0 0.0
      %384 = vmatpush1.msra.mxu0 0.0
      %385 = vmatprep.subr.mxu0 0.0
      %386 = vmatpush1.msra.mxu0 0.0
      %387 = vmatprep.subr.mxu0 0.0
      %388 = vmatpush1.msra.mxu0 0.0
      %389 = vmatprep.subr.mxu0 0.0
      %390 = vmatpush1.msra.mxu0 0.0
      %391 = vmatprep.subr.mxu0 0.0
      %392 = vmatpush1.msra.mxu0 0.0
      %393 = vmatprep.subr.mxu0 0.0
      %394 = vmatpush1.msra.mxu0 0.0
      %395 = vmatprep.subr.mxu0 0.0
      %396 = vmatpush1.msra.mxu0 0.0
      %397 = vmatprep.subr.mxu0 0.0
      %398 = vmatpush1.msra.mxu0 0.0
      %399 = vmatprep.subr.mxu0 0.0
      %400 = vmatpush1.msra.mxu0 0.0
      %401 = vmatprep.subr.mxu0 0.0
      %402 = vmatpush1.msra.mxu0 0.0
      %403 = vmatprep.subr.mxu0 0.0
      %404 = vmatpush1.msra.mxu0 0.0
      %405 = vmatprep.subr.mxu0 0.0
      %406 = vmatpush1.msra.mxu0 0.0
      %407 = vmatprep.subr.mxu0 0.0
      %408 = vmatpush1.msra.mxu0 0.0
      %409 = vmatprep.subr.mxu0 0.0
      %410 = vmatpush1.msra.mxu0 0.0
      %411 = vmatprep.subr.mxu0 0.0
      %412 = vmatpush1.msra.mxu0 0.0
      %413 = vmatprep.subr.mxu0 0.0
      %414 = vmatpush1.msra.mxu0 0.0
      %415 = vmatprep.subr.mxu0 0.0
      %416 = vmatpush1.msra.mxu0 0.0
      %417 = vmatprep.subr.mxu0 0.0
      %418 = vmatpush1.msra.mxu0 0.0
      %419 = vmatprep.subr.mxu0 0.0
      %420 = vmatpush1.msra.mxu0 0.0
      %421 = vmatprep.subr.mxu0 0.0
      %422 = vmatpush1.msra.mxu0 0.0
      %423 = vmatprep.subr.mxu0 0.0
      %424 = vmatpush1.msra.mxu0 0.0
      %425 = vmatprep.subr.mxu0 0.0
      %426 = vmatpush1.msra.mxu0 0.0
      %427 = vmatprep.subr.mxu0 0.0
      %428 = vmatpush1.msra.mxu0 0.0
      %429 = vmatprep.subr.mxu0 0.0
      %430 = vmatpush1.msra.mxu0 0.0
      %431 = vmatprep.subr.mxu0 0.0
      %432 = vmatpush1.msra.mxu0 0.0
      %433 = vmatprep.subr.mxu0 0.0
      %434 = vmatpush1.msra.mxu0 0.0
      %435 = vmatprep.subr.mxu0 0.0
      %436 = vmatpush1.msra.mxu0 0.0
      %437 = vmatprep.subr.mxu0 0.0
      %438 = vmatpush1.msra.mxu0 0.0
      %439 = vmatprep.subr.mxu0 0.0
      %440 = vmatpush1.msra.mxu0 0.0
      %441 = vmatprep.subr.mxu0 0.0
      %442 = vmatpush1.msra.mxu0 0.0
      %443 = vmatprep.subr.mxu0 0.0
      %444 = vmatpush1.msra.mxu0 0.0
      %445 = vmatprep.mubr.f32.mxu0 0.0
      %446 = vmatmul.mubr.f32.gmra.mrb[0].mxu0 %v299
      %v447 = vpop.f32.mrb[0].mxu0
      %v448 = vadd.f32 %v291, %v447
      %v449 = vpop.f32.mrb[0].mxu0
      %v450 = vadd.f32 %v291, %v449
      %451 = vdwg.mxu0
      %452 = vst [vmem:[#allocation2] sm:$0xff] %v377
      %453 = vst [vmem:[#allocation2 + $0x8] sm:$0xff] %v379
      %454 = vst [vmem:[#allocation2 + $0x10] sm:$0xff] %v448
      %455 = vst [vmem:[#allocation2 + $0x18] sm:$0xff] %v450
      %v456 = vld [vmem:[%s3 + $0x8] sm:$0xff]
      %v457 = vld [vmem:[#allocation2] sm:$0xff]
      %v458 = vld [vmem:[#allocation2 + $0x8] sm:$0xff]
      %v459 = vld [vmem:[#allocation2 + $0x10] sm:$0xff]
      %v460 = vld [vmem:[#allocation2 + $0x18] sm:$0xff]
      %v461 = vld [vmem:[%s5 + $0x8] sm:$0xff]
      %463 = vset.pattern.permute.xlu0 0
      %464 = vperm.xlu0 %463, %v461
      %v465 = vpop.permute.xlu0 %464
      %vm467 = vcmask 64512
      %v469 = vsel %vm467, %v456, 0
      %471 = vmatprep.subr.mxu0 %v458
      %472 = vmatpush1.msra.mxu0 %v457
      %473 = vmatprep.subr.mxu0 0.0
      %474 = vmatpush1.msra.mxu0 0.0
      %475 = vmatprep.subr.mxu0 0.0
      %476 = vmatpush1.msra.mxu0 0.0
      %477 = vmatprep.subr.mxu0 0.0
      %478 = vmatpush1.msra.mxu0 0.0
      %479 = vmatprep.subr.mxu0 0.0
      %480 = vmatpush1.msra.mxu0 0.0
      %481 = vmatprep.subr.mxu0 0.0
      %482 = vmatpush1.msra.mxu0 0.0
      %483 = vmatprep.subr.mxu0 0.0
      %484 = vmatpush1.msra.mxu0 0.0
      %485 = vmatprep.subr.mxu0 0.0
      %486 = vmatpush1.msra.mxu0 0.0
      %487 = vmatprep.subr.mxu0 0.0
      %488 = vmatpush1.msra.mxu0 0.0
      %489 = vmatprep.subr.mxu0 0.0
      %490 = vmatpush1.msra.mxu0 0.0
      %491 = vmatprep.subr.mxu0 0.0
      %492 = vmatpush1.msra.mxu0 0.0
      %493 = vmatprep.subr.mxu0 0.0
      %494 = vmatpush1.msra.mxu0 0.0
      %495 = vmatprep.subr.mxu0 0.0
      %496 = vmatpush1.msra.mxu0 0.0
      %497 = vmatprep.subr.mxu0 0.0
      %498 = vmatpush1.msra.mxu0 0.0
      %499 = vmatprep.subr.mxu0 0.0
      %500 = vmatpush1.msra.mxu0 0.0
      %501 = vmatprep.subr.mxu0 0.0
      %502 = vmatpush1.msra.mxu0 0.0
      %503 = vmatprep.subr.mxu0 0.0
      %504 = vmatpush1.msra.mxu0 0.0
      %505 = vmatprep.subr.mxu0 0.0
      %506 = vmatpush1.msra.mxu0 0.0
      %507 = vmatprep.subr.mxu0 0.0
      %508 = vmatpush1.msra.mxu0 0.0
      %509 = vmatprep.subr.mxu0 0.0
      %510 = vmatpush1.msra.mxu0 0.0
      %511 = vmatprep.subr.mxu0 0.0
      %512 = vmatpush1.msra.mxu0 0.0
      %513 = vmatprep.subr.mxu0 0.0
      %514 = vmatpush1.msra.mxu0 0.0
      %515 = vmatprep.subr.mxu0 0.0
      %516 = vmatpush1.msra.mxu0 0.0
      %517 = vmatprep.subr.mxu0 0.0
      %518 = vmatpush1.msra.mxu0 0.0
      %519 = vmatprep.subr.mxu0 0.0
      %520 = vmatpush1.msra.mxu0 0.0
      %521 = vmatprep.subr.mxu0 0.0
      %522 = vmatpush1.msra.mxu0 0.0
      %523 = vmatprep.subr.mxu0 0.0
      %524 = vmatpush1.msra.mxu0 0.0
      %525 = vmatprep.subr.mxu0 0.0
      %526 = vmatpush1.msra.mxu0 0.0
      %527 = vmatprep.subr.mxu0 0.0
      %528 = vmatpush1.msra.mxu0 0.0
      %529 = vmatprep.subr.mxu0 0.0
      %530 = vmatpush1.msra.mxu0 0.0
      %531 = vmatprep.subr.mxu0 0.0
      %532 = vmatpush1.msra.mxu0 0.0
      %533 = vmatprep.subr.mxu0 0.0
      %534 = vmatpush1.msra.mxu0 0.0
      %535 = vmatprep.mubr.f32.mxu0 0.0
      %536 = vmatmul.mubr.f32.gmra.mrb[0].mxu0 %v469
      %v537 = vpop.f32.mrb[0].mxu0
      %v538 = vadd.f32 %v465, %v537
      %v539 = vpop.f32.mrb[0].mxu0
      %v540 = vadd.f32 %v465, %v539
      %541 = vdwg.mxu0
      %542 = vmatprep.subr.mxu0 %v460
      %543 = vmatpush1.msra.mxu0 %v459
      %544 = vmatprep.subr.mxu0 0.0
      %545 = vmatpush1.msra.mxu0 0.0
      %546 = vmatprep.subr.mxu0 0.0
      %547 = vmatpush1.msra.mxu0 0.0
      %548 = vmatprep.subr.mxu0 0.0
      %549 = vmatpush1.msra.mxu0 0.0
      %550 = vmatprep.subr.mxu0 0.0
      %551 = vmatpush1.msra.mxu0 0.0
      %552 = vmatprep.subr.mxu0 0.0
      %553 = vmatpush1.msra.mxu0 0.0
      %554 = vmatprep.subr.mxu0 0.0
      %555 = vmatpush1.msra.mxu0 0.0
      %556 = vmatprep.subr.mxu0 0.0
      %557 = vmatpush1.msra.mxu0 0.0
      %558 = vmatprep.subr.mxu0 0.0
      %559 = vmatpush1.msra.mxu0 0.0
      %560 = vmatprep.subr.mxu0 0.0
      %561 = vmatpush1.msra.mxu0 0.0
      %562 = vmatprep.subr.mxu0 0.0
      %563 = vmatpush1.msra.mxu0 0.0
      %564 = vmatprep.subr.mxu0 0.0
      %565 = vmatpush1.msra.mxu0 0.0
      %566 = vmatprep.subr.mxu0 0.0
      %567 = vmatpush1.msra.mxu0 0.0
      %568 = vmatprep.subr.mxu0 0.0
      %569 = vmatpush1.msra.mxu0 0.0
      %570 = vmatprep.subr.mxu0 0.0
      %571 = vmatpush1.msra.mxu0 0.0
      %572 = vmatprep.subr.mxu0 0.0
      %573 = vmatpush1.msra.mxu0 0.0
      %574 = vmatprep.subr.mxu0 0.0
      %575 = vmatpush1.msra.mxu0 0.0
      %576 = vmatprep.subr.mxu0 0.0
      %577 = vmatpush1.msra.mxu0 0.0
      %578 = vmatprep.subr.mxu0 0.0
      %579 = vmatpush1.msra.mxu0 0.0
      %580 = vmatprep.subr.mxu0 0.0
      %581 = vmatpush1.msra.mxu0 0.0
      %582 = vmatprep.subr.mxu0 0.0
      %583 = vmatpush1.msra.mxu0 0.0
      %584 = vmatprep.subr.mxu0 0.0
      %585 = vmatpush1.msra.mxu0 0.0
      %586 = vmatprep.subr.mxu0 0.0
      %587 = vmatpush1.msra.mxu0 0.0
      %588 = vmatprep.subr.mxu0 0.0
      %589 = vmatpush1.msra.mxu0 0.0
      %590 = vmatprep.subr.mxu0 0.0
      %591 = vmatpush1.msra.mxu0 0.0
      %592 = vmatprep.subr.mxu0 0.0
      %593 = vmatpush1.msra.mxu0 0.0
      %594 = vmatprep.subr.mxu0 0.0
      %595 = vmatpush1.msra.mxu0 0.0
      %596 = vmatprep.subr.mxu0 0.0
      %597 = vmatpush1.msra.mxu0 0.0
      %598 = vmatprep.subr.mxu0 0.0
      %599 = vmatpush1.msra.mxu0 0.0
      %600 = vmatprep.subr.mxu0 0.0
      %601 = vmatpush1.msra.mxu0 0.0
      %602 = vmatprep.subr.mxu0 0.0
      %603 = vmatpush1.msra.mxu0 0.0
      %604 = vmatprep.subr.mxu0 0.0
      %605 = vmatpush1.msra.mxu0 0.0
      %606 = vmatprep.mubr.f32.mxu0 0.0
      %607 = vmatmul.mubr.f32.gmra.mrb[0].mxu0 %v469
      %v608 = vpop.f32.mrb[0].mxu0
      %v609 = vadd.f32 %v465, %v608
      %v610 = vpop.f32.mrb[0].mxu0
      %v611 = vadd.f32 %v465, %v610
      %612 = vdwg.mxu0
      %v613 = vmax.f32 %v538, 0.0
      %v614 = vmax.f32 %v540, 0.0
      %v615 = vmax.f32 %v609, 0.0
      %v616 = vmax.f32 %v611, 0.0
      %617 = vrot.lane.b32.xlu0 %v613, 17
      %v618 = vpop.permute.xlu0 %617
      %619 = vrot.lane.b32.xlu0 %v614, 17
      %v620 = vpop.permute.xlu0 %619
      %621 = vrot.lane.b32.xlu0 %v615, 17
      %v622 = vpop.permute.xlu0 %621
      %623 = vrot.lane.b32.xlu0 %v616, 17
      %v624 = vpop.permute.xlu0 %623
      %v625 = vlaneseq
      %v626 = vand.u32 %v625, 127
      %vm627 = vcmp.lt.s32.totalorder %v626, 17
      %v628 = vsel %vm627, %v622, %v624
      %v629 = vsel %vm627, %v620, %v622
      %v630 = vsel %vm627, %v618, %v620
      %v631 = vsel %vm627, %v624, %v618
      %v632 = vlaneseq
      %v633 = vshrl.u32 %v632, 7
      %v634 = vsub.s32 0, %v633
      %v635 = vrot.slane %v272, %v634
      %v636 = vlaneseq
      %v637 = vshrl.u32 %v636, 7
      %v638 = vsub.s32 0, %v637
      %v639 = vrot.slane %v273, %v638
      %v640 = vlaneseq
      %v641 = vshrl.u32 %v640, 7
      %v642 = vsub.s32 0, %v641
      %v643 = vrot.slane %v274, %v642
      %v644 = vlaneseq
      %v645 = vshrl.u32 %v644, 7
      %v646 = vsub.s32 0, %v645
      %v647 = vrot.slane %v275, %v646
      %v648 = vmul.f32 %v631, %v635
      %v649 = vmul.f32 %v630, %v639
      %v650 = vmul.f32 %v629, %v643
      %v651 = vmul.f32 %v628, %v647
      %652 = vst [vmem:[#allocation3] sm:$0xff] %v648
      %653 = vst [vmem:[#allocation3 + $0x8] sm:$0xff] %v649
      %654 = vst [vmem:[#allocation3 + $0x10] sm:$0xff] %v650
      %655 = vst [vmem:[#allocation3 + $0x18] sm:$0xff] %v651
      %656 = vrot.lane.b32.xlu0 %v613, 16
      %v657 = vpop.permute.xlu0 %656
      %658 = vrot.lane.b32.xlu0 %v614, 16
      %v659 = vpop.permute.xlu0 %658
      %660 = vrot.lane.b32.xlu0 %v615, 16
      %v661 = vpop.permute.xlu0 %660
      %662 = vrot.lane.b32.xlu0 %v616, 16
      %v663 = vpop.permute.xlu0 %662
      %vm664 = vcmp.lt.s32.totalorder %v626, 16
      %v665 = vsel %vm664, %v661, %v663
      %v666 = vsel %vm664, %v659, %v661
      %v667 = vsel %vm664, %v657, %v659
      %v668 = vsel %vm664, %v663, %v657
      %v669 = vlaneseq
      %v670 = vshrl.u32 %v669, 7
      %v671 = vsub.s32 1, %v670
      %v672 = vrot.slane %v272, %v671
      %v673 = vlaneseq
      %v674 = vshrl.u32 %v673, 7
      %v675 = vsub.s32 1, %v674
      %v676 = vrot.slane %v273, %v675
      %v677 = vlaneseq
      %v678 = vshrl.u32 %v677, 7
      %v679 = vsub.s32 1, %v678
      %v680 = vrot.slane %v274, %v679
      %v681 = vlaneseq
      %v682 = vshrl.u32 %v681, 7
      %v683 = vsub.s32 1, %v682
      %v684 = vrot.slane %v275, %v683
      %v685 = vmul.f32 %v668, %v672
      %v686 = vmul.f32 %v667, %v676
      %v687 = vmul.f32 %v666, %v680
      %v688 = vmul.f32 %v665, %v684
      %689 = vst [vmem:[#allocation3 + $0x20] sm:$0xff] %v685
      %690 = vst [vmem:[#allocation3 + $0x28] sm:$0xff] %v686
      %691 = vst [vmem:[#allocation3 + $0x30] sm:$0xff] %v687
      %692 = vst [vmem:[#allocation3 + $0x38] sm:$0xff] %v688
      %693 = vrot.lane.b32.xlu0 %v613, 15
      %v694 = vpop.permute.xlu0 %693
      %695 = vrot.lane.b32.xlu0 %v614, 15
      %v696 = vpop.permute.xlu0 %695
      %697 = vrot.lane.b32.xlu0 %v615, 15
      %v698 = vpop.permute.xlu0 %697
      %699 = vrot.lane.b32.xlu0 %v616, 15
      %v700 = vpop.permute.xlu0 %699
      %vm701 = vcmp.lt.s32.totalorder %v626, 15
      %v702 = vsel %vm701, %v698, %v700
      %v703 = vsel %vm701, %v696, %v698
      %v704 = vsel %vm701, %v694, %v696
      %v705 = vsel %vm701, %v700, %v694
      %v706 = vlaneseq
      %v707 = vshrl.u32 %v706, 7
      %v708 = vsub.s32 2, %v707
      %v709 = vrot.slane %v272, %v708
      %v710 = vlaneseq
      %v711 = vshrl.u32 %v710, 7
      %v712 = vsub.s32 2, %v711
      %v713 = vrot.slane %v273, %v712
      %v714 = vlaneseq
      %v715 = vshrl.u32 %v714, 7
      %v716 = vsub.s32 2, %v715
      %v717 = vrot.slane %v274, %v716
      %v718 = vlaneseq
      %v719 = vshrl.u32 %v718, 7
      %v720 = vsub.s32 2, %v719
      %v721 = vrot.slane %v275, %v720
      %v722 = vmul.f32 %v705, %v709
      %v723 = vmul.f32 %v704, %v713
      %v724 = vmul.f32 %v703, %v717
      %v725 = vmul.f32 %v702, %v721
      %726 = vst [vmem:[#allocation3 + $0x40] sm:$0xff] %v722
      %727 = vst [vmem:[#allocation3 + $0x48] sm:$0xff] %v723
      %728 = vst [vmem:[#allocation3 + $0x50] sm:$0xff] %v724
      %729 = vst [vmem:[#allocation3 + $0x58] sm:$0xff] %v725
      %730 = vrot.lane.b32.xlu0 %v613, 1
      %v731 = vpop.permute.xlu0 %730
      %732 = vrot.lane.b32.xlu0 %v614, 1
      %v733 = vpop.permute.xlu0 %732
      %734 = vrot.lane.b32.xlu0 %v615, 1
      %v735 = vpop.permute.xlu0 %734
      %736 = vrot.lane.b32.xlu0 %v616, 1
      %v737 = vpop.permute.xlu0 %736
      %vm738 = vcmp.lt.s32.totalorder %v626, 1
      %v739 = vsel %vm738, %v735, %v737
      %v740 = vsel %vm738, %v733, %v735
      %v741 = vsel %vm738, %v731, %v733
      %v742 = vsel %vm738, %v737, %v731
      %v743 = vlaneseq
      %v744 = vshrl.u32 %v743, 7
      %v745 = vsub.s32 3, %v744
      %v746 = vrot.slane %v272, %v745
      %v747 = vlaneseq
      %v748 = vshrl.u32 %v747, 7
      %v749 = vsub.s32 3, %v748
      %v750 = vrot.slane %v273, %v749
      %v751 = vlaneseq
      %v752 = vshrl.u32 %v751, 7
      %v753 = vsub.s32 3, %v752
      %v754 = vrot.slane %v274, %v753
      %v755 = vlaneseq
      %v756 = vshrl.u32 %v755, 7
      %v757 = vsub.s32 3, %v756
      %v758 = vrot.slane %v275, %v757
      %v759 = vmul.f32 %v742, %v746
      %v760 = vmul.f32 %v741, %v750
      %v761 = vmul.f32 %v740, %v754
      %v762 = vmul.f32 %v739, %v758
      %763 = vst [vmem:[#allocation3 + $0x60] sm:$0xff] %v759
      %764 = vst [vmem:[#allocation3 + $0x68] sm:$0xff] %v760
      %765 = vst [vmem:[#allocation3 + $0x70] sm:$0xff] %v761
      %766 = vst [vmem:[#allocation3 + $0x78] sm:$0xff] %v762
      %767 = vst [vmem:[#allocation3 + $0x80] sm:$0xff] %v613
      %768 = vst [vmem:[#allocation3 + $0x88] sm:$0xff] %v614
      %769 = vst [vmem:[#allocation3 + $0x90] sm:$0xff] %v615
      %770 = vst [vmem:[#allocation3 + $0x98] sm:$0xff] %v616
      %771 = vrot.lane.b32.xlu0 %v613, 127
      %v772 = vpop.permute.xlu0 %771
      %773 = vrot.lane.b32.xlu0 %v614, 127
      %v774 = vpop.permute.xlu0 %773
      %775 = vrot.lane.b32.xlu0 %v615, 127
      %v776 = vpop.permute.xlu0 %775
      %777 = vrot.lane.b32.xlu0 %v616, 127
      %v778 = vpop.permute.xlu0 %777
      %vm779 = vcmp.lt.s32.totalorder %v626, 127
      %v780 = vsel %vm779, %v776, %v778
      %v781 = vsel %vm779, %v774, %v776
      %v782 = vsel %vm779, %v772, %v774
      %v783 = vsel %vm779, %v778, %v772
      %v784 = vlaneseq
      %v785 = vshrl.u32 %v784, 7
      %v786 = vsub.s32 5, %v785
      %v787 = vrot.slane %v272, %v786
      %v788 = vlaneseq
      %v789 = vshrl.u32 %v788, 7
      %v790 = vsub.s32 5, %v789
      %v791 = vrot.slane %v273, %v790
      %v792 = vlaneseq
      %v793 = vshrl.u32 %v792, 7
      %v794 = vsub.s32 5, %v793
      %v795 = vrot.slane %v274, %v794
      %v796 = vlaneseq
      %v797 = vshrl.u32 %v796, 7
      %v798 = vsub.s32 5, %v797
      %v799 = vrot.slane %v275, %v798
      %v800 = vmul.f32 %v782, %v787
      %v801 = vmul.f32 %v781, %v791
      %v802 = vmul.f32 %v780, %v795
      %v803 = vmul.f32 %v783, %v799
      %804 = vst [vmem:[#allocation3 + $0xa0] sm:$0xff] %v800
      %805 = vst [vmem:[#allocation3 + $0xa8] sm:$0xff] %v801
      %806 = vst [vmem:[#allocation3 + $0xb0] sm:$0xff] %v802
      %807 = vst [vmem:[#allocation3 + $0xb8] sm:$0xff] %v803
      %808 = vrot.lane.b32.xlu0 %v613, 113
      %v809 = vpop.permute.xlu0 %808
      %810 = vrot.lane.b32.xlu0 %v614, 113
      %v811 = vpop.permute.xlu0 %810
      %812 = vrot.lane.b32.xlu0 %v615, 113
      %v813 = vpop.permute.xlu0 %812
      %814 = vrot.lane.b32.xlu0 %v616, 113
      %v815 = vpop.permute.xlu0 %814
      %vm816 = vcmp.lt.s32.totalorder %v626, 113
      %v817 = vsel %vm816, %v813, %v815
      %v818 = vsel %vm816, %v811, %v813
      %v819 = vsel %vm816, %v809, %v811
      %v820 = vsel %vm816, %v815, %v809
      %v821 = vlaneseq
      %v822 = vshrl.u32 %v821, 7
      %v823 = vsub.s32 6, %v822
      %v824 = vrot.slane %v272, %v823
      %v825 = vlaneseq
      %v826 = vshrl.u32 %v825, 7
      %v827 = vsub.s32 6, %v826
      %v828 = vrot.slane %v273, %v827
      %v829 = vlaneseq
      %v830 = vshrl.u32 %v829, 7
      %v831 = vsub.s32 6, %v830
      %v832 = vrot.slane %v274, %v831
      %v833 = vlaneseq
      %v834 = vshrl.u32 %v833, 7
      %v835 = vsub.s32 6, %v834
      %v836 = vrot.slane %v275, %v835
      %v837 = vmul.f32 %v819, %v824
      %v838 = vmul.f32 %v818, %v828
      %v839 = vmul.f32 %v817, %v832
      %v840 = vmul.f32 %v820, %v836
      %841 = vst [vmem:[#allocation3 + $0xc0] sm:$0xff] %v837
      %842 = vst [vmem:[#allocation3 + $0xc8] sm:$0xff] %v838
      %843 = vst [vmem:[#allocation3 + $0xd0] sm:$0xff] %v839
      %844 = vst [vmem:[#allocation3 + $0xd8] sm:$0xff] %v840
      %845 = vrot.lane.b32.xlu0 %v613, 112
      %v846 = vpop.permute.xlu0 %845
      %847 = vrot.lane.b32.xlu0 %v614, 112
      %v848 = vpop.permute.xlu0 %847
      %849 = vrot.lane.b32.xlu0 %v615, 112
      %v850 = vpop.permute.xlu0 %849
      %851 = vrot.lane.b32.xlu0 %v616, 112
      %v852 = vpop.permute.xlu0 %851
      %vm853 = vcmp.lt.s32.totalorder %v626, 112
      %v854 = vsel %vm853, %v850, %v852
      %v855 = vsel %vm853, %v848, %v850
      %v856 = vsel %vm853, %v846, %v848
      %v857 = vsel %vm853, %v852, %v846
      %v858 = vlaneseq
      %v859 = vshrl.u32 %v858, 7
      %v860 = vsub.s32 7, %v859
      %v861 = vrot.slane %v272, %v860
      %v862 = vlaneseq
      %v863 = vshrl.u32 %v862, 7
      %v864 = vsub.s32 7, %v863
      %v865 = vrot.slane %v273, %v864
      %v866 = vlaneseq
      %v867 = vshrl.u32 %v866, 7
      %v868 = vsub.s32 7, %v867
      %v869 = vrot.slane %v274, %v868
      %v870 = vlaneseq
      %v871 = vshrl.u32 %v870, 7
      %v872 = vsub.s32 7, %v871
      %v873 = vrot.slane %v275, %v872
      %v874 = vmul.f32 %v856, %v861
      %v875 = vmul.f32 %v855, %v865
      %v876 = vmul.f32 %v854, %v869
      %v877 = vmul.f32 %v857, %v873
      %878 = vst [vmem:[#allocation3 + $0xe0] sm:$0xff] %v874
      %879 = vst [vmem:[#allocation3 + $0xe8] sm:$0xff] %v875
      %880 = vst [vmem:[#allocation3 + $0xf0] sm:$0xff] %v876
      %881 = vst [vmem:[#allocation3 + $0xf8] sm:$0xff] %v877
      %882 = vrot.lane.b32.xlu0 %v613, 111
      %v883 = vpop.permute.xlu0 %882
      %884 = vrot.lane.b32.xlu0 %v614, 111
      %v885 = vpop.permute.xlu0 %884
      %886 = vrot.lane.b32.xlu0 %v615, 111
      %v887 = vpop.permute.xlu0 %886
      %888 = vrot.lane.b32.xlu0 %v616, 111
      %v889 = vpop.permute.xlu0 %888
      %vm890 = vcmp.lt.s32.totalorder %v626, 111
      %v891 = vsel %vm890, %v887, %v889
      %v892 = vsel %vm890, %v885, %v887
      %v893 = vsel %vm890, %v883, %v885
      %v894 = vsel %vm890, %v889, %v883
      %v895 = vlaneseq
      %v896 = vshrl.u32 %v895, 7
      %v897 = vsub.s32 0, %v896
      %v898 = vrot.slane %v276, %v897
      %v899 = vlaneseq
      %v900 = vshrl.u32 %v899, 7
      %v901 = vsub.s32 0, %v900
      %v902 = vrot.slane %v277, %v901
      %v903 = vlaneseq
      %v904 = vshrl.u32 %v903, 7
      %v905 = vsub.s32 0, %v904
      %v906 = vrot.slane %v278, %v905
      %v907 = vlaneseq
      %v908 = vshrl.u32 %v907, 7
      %v909 = vsub.s32 0, %v908
      %v910 = vrot.slane %v279, %v909
      %v911 = vmul.f32 %v893, %v898
      %v912 = vmul.f32 %v892, %v902
      %v913 = vmul.f32 %v891, %v906
      %v914 = vmul.f32 %v894, %v910
      %915 = vst [vmem:[#allocation3 + $0x100] sm:$0xff] %v911
      %916 = vst [vmem:[#allocation3 + $0x108] sm:$0xff] %v912
      %917 = vst [vmem:[#allocation3 + $0x110] sm:$0xff] %v913
      %918 = vst [vmem:[#allocation3 + $0x118] sm:$0xff] %v914
      %v919 = vld [vmem:[%s4] sm:$0xff]
      %v920 = vld [vmem:[#allocation3] sm:$0xff]
      %v921 = vld [vmem:[#allocation3 + $0x8] sm:$0xff]
      %v922 = vld [vmem:[#allocation3 + $0x10] sm:$0xff]
      %v923 = vld [vmem:[#allocation3 + $0x18] sm:$0xff]
      %v924 = vld [vmem:[#allocation3 + $0x20] sm:$0xff]
      %v925 = vld [vmem:[#allocation3 + $0x28] sm:$0xff]
      %v926 = vld [vmem:[#allocation3 + $0x30] sm:$0xff]
      %v927 = vld [vmem:[#allocation3 + $0x38] sm:$0xff]
      %v928 = vld [vmem:[#allocation3 + $0x40] sm:$0xff]
      %v929 = vld [vmem:[#allocation3 + $0x48] sm:$0xff]
      %v930 = vld [vmem:[#allocation3 + $0x50] sm:$0xff]
      %v931 = vld [vmem:[#allocation3 + $0x58] sm:$0xff]
      %v932 = vld [vmem:[#allocation3 + $0x60] sm:$0xff]
      %v933 = vld [vmem:[#allocation3 + $0x68] sm:$0xff]
      %v934 = vld [vmem:[#allocation3 + $0x70] sm:$0xff]
      %v935 = vld [vmem:[#allocation3 + $0x78] sm:$0xff]
      %v936 = vld [vmem:[#allocation3 + $0x80] sm:$0xff]
      %v937 = vld [vmem:[#allocation3 + $0x88] sm:$0xff]
      %v938 = vld [vmem:[#allocation3 + $0x90] sm:$0xff]
      %v939 = vld [vmem:[#allocation3 + $0x98] sm:$0xff]
      %v940 = vld [vmem:[#allocation3 + $0xa0] sm:$0xff]
      %v941 = vld [vmem:[#allocation3 + $0xa8] sm:$0xff]
      %v942 = vld [vmem:[#allocation3 + $0xb0] sm:$0xff]
      %v943 = vld [vmem:[#allocation3 + $0xb8] sm:$0xff]
      %v944 = vld [vmem:[#allocation3 + $0xc0] sm:$0xff]
      %v945 = vld [vmem:[#allocation3 + $0xc8] sm:$0xff]
      %v946 = vld [vmem:[#allocation3 + $0xd0] sm:$0xff]
      %v947 = vld [vmem:[#allocation3 + $0xd8] sm:$0xff]
      %v948 = vld [vmem:[#allocation3 + $0xe0] sm:$0xff]
      %v949 = vld [vmem:[#allocation3 + $0xe8] sm:$0xff]
      %v950 = vld [vmem:[#allocation3 + $0xf0] sm:$0xff]
      %v951 = vld [vmem:[#allocation3 + $0xf8] sm:$0xff]
      %v952 = vld [vmem:[#allocation3 + $0x100] sm:$0xff]
      %v953 = vld [vmem:[#allocation3 + $0x108] sm:$0xff]
      %v954 = vld [vmem:[#allocation3 + $0x110] sm:$0xff]
      %v955 = vld [vmem:[#allocation3 + $0x118] sm:$0xff]
      %v956 = vld [vmem:[%s5 + $0x10] sm:$0xff]
      %958 = vset.pattern.permute.xlu0 0
      %959 = vperm.xlu0 %958, %v956
      %v960 = vpop.permute.xlu0 %959
      %vm962 = vcmask 588800
      %v964 = vsel %vm962, %v919, 0
      %966 = vmatprep.subr.mxu0 %v921
      %967 = vmatpush1.msra.mxu0 %v920
      %968 = vmatprep.subr.mxu0 %v925
      %969 = vmatpush1.msra.mxu0 %v924
      %970 = vmatprep.subr.mxu0 %v929
      %971 = vmatpush1.msra.mxu0 %v928
      %972 = vmatprep.subr.mxu0 %v933
      %973 = vmatpush1.msra.mxu0 %v932
      %974 = vmatprep.subr.mxu0 %v937
      %975 = vmatpush1.msra.mxu0 %v936
      %976 = vmatprep.subr.mxu0 %v941
      %977 = vmatpush1.msra.mxu0 %v940
      %978 = vmatprep.subr.mxu0 %v945
      %979 = vmatpush1.msra.mxu0 %v944
      %980 = vmatprep.subr.mxu0 %v949
      %981 = vmatpush1.msra.mxu0 %v948
      %982 = vmatprep.subr.mxu0 %v953
      %983 = vmatpush1.msra.mxu0 %v952
      %984 = vmatprep.subr.mxu0 0.0
      %985 = vmatpush1.msra.mxu0 0.0
      %986 = vmatprep.subr.mxu0 0.0
      %987 = vmatpush1.msra.mxu0 0.0
      %988 = vmatprep.subr.mxu0 0.0
      %989 = vmatpush1.msra.mxu0 0.0
      %990 = vmatprep.subr.mxu0 0.0
      %991 = vmatpush1.msra.mxu0 0.0
      %992 = vmatprep.subr.mxu0 0.0
      %993 = vmatpush1.msra.mxu0 0.0
      %994 = vmatprep.subr.mxu0 0.0
      %995 = vmatpush1.msra.mxu0 0.0
      %996 = vmatprep.subr.mxu0 0.0
      %997 = vmatpush1.msra.mxu0 0.0
      %998 = vmatprep.subr.mxu0 0.0
      %999 = vmatpush1.msra.mxu0 0.0
      %1000 = vmatprep.subr.mxu0 0.0
      %1001 = vmatpush1.msra.mxu0 0.0
      %1002 = vmatprep.subr.mxu0 0.0
      %1003 = vmatpush1.msra.mxu0 0.0
      %1004 = vmatprep.subr.mxu0 0.0
      %1005 = vmatpush1.msra.mxu0 0.0
      %1006 = vmatprep.subr.mxu0 0.0
      %1007 = vmatpush1.msra.mxu0 0.0
      %1008 = vmatprep.subr.mxu0 0.0
      %1009 = vmatpush1.msra.mxu0 0.0
      %1010 = vmatprep.subr.mxu0 0.0
      %1011 = vmatpush1.msra.mxu0 0.0
      %1012 = vmatprep.subr.mxu0 0.0
      %1013 = vmatpush1.msra.mxu0 0.0
      %1014 = vmatprep.subr.mxu0 0.0
      %1015 = vmatpush1.msra.mxu0 0.0
      %1016 = vmatprep.subr.mxu0 0.0
      %1017 = vmatpush1.msra.mxu0 0.0
      %1018 = vmatprep.subr.mxu0 0.0
      %1019 = vmatpush1.msra.mxu0 0.0
      %1020 = vmatprep.subr.mxu0 0.0
      %1021 = vmatpush1.msra.mxu0 0.0
      %1022 = vmatprep.subr.mxu0 0.0
      %1023 = vmatpush1.msra.mxu0 0.0
      %1024 = vmatprep.subr.mxu0 0.0
      %1025 = vmatpush1.msra.mxu0 0.0
      %1026 = vmatprep.subr.mxu0 0.0
      %1027 = vmatpush1.msra.mxu0 0.0
      %1028 = vmatprep.subr.mxu0 0.0
      %1029 = vmatpush1.msra.mxu0 0.0
      %1030 = vmatprep.mubr.f32.mxu0 0.0
      %1031 = vmatmul.mubr.f32.gmra.mrb[0].mxu0 %v964
      %v1032 = vpop.f32.mrb[0].mxu0
      %v1033 = vadd.f32 %v960, %v1032
      %v1034 = vpop.f32.mrb[0].mxu0
      %v1035 = vadd.f32 %v960, %v1034
      %1036 = vdwg.mxu0
      %1037 = vmatprep.subr.mxu0 %v923
      %1038 = vmatpush1.msra.mxu0 %v922
      %1039 = vmatprep.subr.mxu0 %v927
      %1040 = vmatpush1.msra.mxu0 %v926
      %1041 = vmatprep.subr.mxu0 %v931
      %1042 = vmatpush1.msra.mxu0 %v930
      %1043 = vmatprep.subr.mxu0 %v935
      %1044 = vmatpush1.msra.mxu0 %v934
      %1045 = vmatprep.subr.mxu0 %v939
      %1046 = vmatpush1.msra.mxu0 %v938
      %1047 = vmatprep.subr.mxu0 %v943
      %1048 = vmatpush1.msra.mxu0 %v942
      %1049 = vmatprep.subr.mxu0 %v947
      %1050 = vmatpush1.msra.mxu0 %v946
      %1051 = vmatprep.subr.mxu0 %v951
      %1052 = vmatpush1.msra.mxu0 %v950
      %1053 = vmatprep.subr.mxu0 %v955
      %1054 = vmatpush1.msra.mxu0 %v954
      %1055 = vmatprep.subr.mxu0 0.0
      %1056 = vmatpush1.msra.mxu0 0.0
      %1057 = vmatprep.subr.mxu0 0.0
      %1058 = vmatpush1.msra.mxu0 0.0
      %1059 = vmatprep.subr.mxu0 0.0
      %1060 = vmatpush1.msra.mxu0 0.0
      %1061 = vmatprep.subr.mxu0 0.0
      %1062 = vmatpush1.msra.mxu0 0.0
      %1063 = vmatprep.subr.mxu0 0.0
      %1064 = vmatpush1.msra.mxu0 0.0
      %1065 = vmatprep.subr.mxu0 0.0
      %1066 = vmatpush1.msra.mxu0 0.0
      %1067 = vmatprep.subr.mxu0 0.0
      %1068 = vmatpush1.msra.mxu0 0.0
      %1069 = vmatprep.subr.mxu0 0.0
      %1070 = vmatpush1.msra.mxu0 0.0
      %1071 = vmatprep.subr.mxu0 0.0
      %1072 = vmatpush1.msra.mxu0 0.0
      %1073 = vmatprep.subr.mxu0 0.0
      %1074 = vmatpush1.msra.mxu0 0.0
      %1075 = vmatprep.subr.mxu0 0.0
      %1076 = vmatpush1.msra.mxu0 0.0
      %1077 = vmatprep.subr.mxu0 0.0
      %1078 = vmatpush1.msra.mxu0 0.0
      %1079 = vmatprep.subr.mxu0 0.0
      %1080 = vmatpush1.msra.mxu0 0.0
      %1081 = vmatprep.subr.mxu0 0.0
      %1082 = vmatpush1.msra.mxu0 0.0
      %1083 = vmatprep.subr.mxu0 0.0
      %1084 = vmatpush1.msra.mxu0 0.0
      %1085 = vmatprep.subr.mxu0 0.0
      %1086 = vmatpush1.msra.mxu0 0.0
      %1087 = vmatprep.subr.mxu0 0.0
      %1088 = vmatpush1.msra.mxu0 0.0
      %1089 = vmatprep.subr.mxu0 0.0
      %1090 = vmatpush1.msra.mxu0 0.0
      %1091 = vmatprep.subr.mxu0 0.0
      %1092 = vmatpush1.msra.mxu0 0.0
      %1093 = vmatprep.subr.mxu0 0.0
      %1094 = vmatpush1.msra.mxu0 0.0
      %1095 = vmatprep.subr.mxu0 0.0
      %1096 = vmatpush1.msra.mxu0 0.0
      %1097 = vmatprep.subr.mxu0 0.0
      %1098 = vmatpush1.msra.mxu0 0.0
      %1099 = vmatprep.subr.mxu0 0.0
      %1100 = vmatpush1.msra.mxu0 0.0
      %1101 = vmatprep.mubr.f32.mxu0 0.0
      %1102 = vmatmul.mubr.f32.gmra.mrb[0].mxu0 %v964
      %v1103 = vpop.f32.mrb[0].mxu0
      %v1104 = vadd.f32 %v960, %v1103
      %v1105 = vpop.f32.mrb[0].mxu0
      %v1106 = vadd.f32 %v960, %v1105
      %1107 = vdwg.mxu0
      %v1108 = vmax.f32 %v1033, 0.0
      %v1109 = vmax.f32 %v1035, 0.0
      %v1110 = vmax.f32 %v1104, 0.0
      %v1111 = vmax.f32 %v1106, 0.0
      %1112 = vst [vmem:[#allocation2 + $0x20] sm:$0xff] %v1108
      %1113 = vst [vmem:[#allocation2 + $0x28] sm:$0xff] %v1109
      %1114 = vst [vmem:[#allocation2 + $0x30] sm:$0xff] %v1110
      %1115 = vst [vmem:[#allocation2 + $0x38] sm:$0xff] %v1111
      %v1116 = vld [vmem:[%s3 + $0x10] sm:$0xff]
      %v1117 = vld [vmem:[%s3 + $0x18] sm:$0xff]
      %v1118 = vld [vmem:[#allocation2] sm:$0xff]
      %v1119 = vld [vmem:[#allocation2 + $0x8] sm:$0xff]
      %v1120 = vld [vmem:[#allocation2 + $0x10] sm:$0xff]
      %v1121 = vld [vmem:[#allocation2 + $0x18] sm:$0xff]
      %v1122 = vld [vmem:[#allocation2 + $0x20] sm:$0xff]
      %v1123 = vld [vmem:[#allocation2 + $0x28] sm:$0xff]
      %v1124 = vld [vmem:[#allocation2 + $0x30] sm:$0xff]
      %v1125 = vld [vmem:[#allocation2 + $0x38] sm:$0xff]
      %v1126 = vld [vmem:[%s5 + $0x18] sm:$0xff]
      %v1127 = vld [vmem:[%s5 + $0x20] sm:$0xff]
      %1129 = vset.pattern.permute.xlu0 0
      %1130 = vperm.xlu0 %1129, %v1126
      %v1131 = vpop.permute.xlu0 %1130
      %1134 = vset.pattern.permute.xlu0 0
      %1135 = vperm.xlu0 %1134, %v1127
      %v1136 = vpop.permute.xlu0 %1135
      %vm1138 = vcmask 130048
      %v1140 = vsel %vm1138, %v1116, 0
      %v1143 = vsel %vm1138, %v1117, 0
      %1145 = vmatprep.subr.mxu0 %v1119
      %1146 = vmatpush1.msra.mxu0 %v1118
      %1147 = vmatprep.subr.mxu0 %v1123
      %1148 = vmatpush1.msra.mxu0 %v1122
      %1149 = vmatprep.subr.mxu0 0.0
      %1150 = vmatpush1.msra.mxu0 0.0
      %1151 = vmatprep.subr.mxu0 0.0
      %1152 = vmatpush1.msra.mxu0 0.0
      %1153 = vmatprep.subr.mxu0 0.0
      %1154 = vmatpush1.msra.mxu0 0.0
      %1155 = vmatprep.subr.mxu0 0.0
      %1156 = vmatpush1.msra.mxu0 0.0
      %1157 = vmatprep.subr.mxu0 0.0
      %1158 = vmatpush1.msra.mxu0 0.0
      %1159 = vmatprep.subr.mxu0 0.0
      %1160 = vmatpush1.msra.mxu0 0.0
      %1161 = vmatprep.subr.mxu0 0.0
      %1162 = vmatpush1.msra.mxu0 0.0
      %1163 = vmatprep.subr.mxu0 0.0
      %1164 = vmatpush1.msra.mxu0 0.0
      %1165 = vmatprep.subr.mxu0 0.0
      %1166 = vmatpush1.msra.mxu0 0.0
      %1167 = vmatprep.subr.mxu0 0.0
      %1168 = vmatpush1.msra.mxu0 0.0
      %1169 = vmatprep.subr.mxu0 0.0
      %1170 = vmatpush1.msra.mxu0 0.0
      %1171 = vmatprep.subr.mxu0 0.0
      %1172 = vmatpush1.msra.mxu0 0.0
      %1173 = vmatprep.subr.mxu0 0.0
      %1174 = vmatpush1.msra.mxu0 0.0
      %1175 = vmatprep.subr.mxu0 0.0
      %1176 = vmatpush1.msra.mxu0 0.0
      %1177 = vmatprep.subr.mxu0 0.0
      %1178 = vmatpush1.msra.mxu0 0.0
      %1179 = vmatprep.subr.mxu0 0.0
      %1180 = vmatpush1.msra.mxu0 0.0
      %1181 = vmatprep.subr.mxu0 0.0
      %1182 = vmatpush1.msra.mxu0 0.0
      %1183 = vmatprep.subr.mxu0 0.0
      %1184 = vmatpush1.msra.mxu0 0.0
      %1185 = vmatprep.subr.mxu0 0.0
      %1186 = vmatpush1.msra.mxu0 0.0
      %1187 = vmatprep.subr.mxu0 0.0
      %1188 = vmatpush1.msra.mxu0 0.0
      %1189 = vmatprep.subr.mxu0 0.0
      %1190 = vmatpush1.msra.mxu0 0.0
      %1191 = vmatprep.subr.mxu0 0.0
      %1192 = vmatpush1.msra.mxu0 0.0
      %1193 = vmatprep.subr.mxu0 0.0
      %1194 = vmatpush1.msra.mxu0 0.0
      %1195 = vmatprep.subr.mxu0 0.0
      %1196 = vmatpush1.msra.mxu0 0.0
      %1197 = vmatprep.subr.mxu0 0.0
      %1198 = vmatpush1.msra.mxu0 0.0
      %1199 = vmatprep.subr.mxu0 0.0
      %1200 = vmatpush1.msra.mxu0 0.0
      %1201 = vmatprep.subr.mxu0 0.0
      %1202 = vmatpush1.msra.mxu0 0.0
      %1203 = vmatprep.subr.mxu0 0.0
      %1204 = vmatpush1.msra.mxu0 0.0
      %1205 = vmatprep.subr.mxu0 0.0
      %1206 = vmatpush1.msra.mxu0 0.0
      %1207 = vmatprep.subr.mxu0 0.0
      %1208 = vmatpush1.msra.mxu0 0.0
      %1209 = vmatprep.mubr.f32.mxu0 0.0
      %1210 = vmatmul.mubr.f32.gmra.mrb[0].mxu0 %v1140
      %v1211 = vpop.f32.mrb[0].mxu0
      %v1212 = vadd.f32 %v1131, %v1211
      %v1213 = vpop.f32.mrb[0].mxu0
      %v1214 = vadd.f32 %v1131, %v1213
      %1215 = vmatprep.mubr.f32.mxu0 0.0
      %1216 = vmatmul.mubr.f32.gmra.mrb[0].mxu0 %v1143
      %v1217 = vpop.f32.mrb[0].mxu0
      %v1218 = vadd.f32 %v1136, %v1217
      %v1219 = vpop.f32.mrb[0].mxu0
      %v1220 = vadd.f32 %v1136, %v1219
      %1221 = vdwg.mxu0
      %1222 = vmatprep.subr.mxu0 %v1121
      %1223 = vmatpush1.msra.mxu0 %v1120
      %1224 = vmatprep.subr.mxu0 %v1125
      %1225 = vmatpush1.msra.mxu0 %v1124
      %1226 = vmatprep.subr.mxu0 0.0
      %1227 = vmatpush1.msra.mxu0 0.0
      %1228 = vmatprep.subr.mxu0 0.0
      %1229 = vmatpush1.msra.mxu0 0.0
      %1230 = vmatprep.subr.mxu0 0.0
      %1231 = vmatpush1.msra.mxu0 0.0
      %1232 = vmatprep.subr.mxu0 0.0
      %1233 = vmatpush1.msra.mxu0 0.0
      %1234 = vmatprep.subr.mxu0 0.0
      %1235 = vmatpush1.msra.mxu0 0.0
      %1236 = vmatprep.subr.mxu0 0.0
      %1237 = vmatpush1.msra.mxu0 0.0
      %1238 = vmatprep.subr.mxu0 0.0
      %1239 = vmatpush1.msra.mxu0 0.0
      %1240 = vmatprep.subr.mxu0 0.0
      %1241 = vmatpush1.msra.mxu0 0.0
      %1242 = vmatprep.subr.mxu0 0.0
      %1243 = vmatpush1.msra.mxu0 0.0
      %1244 = vmatprep.subr.mxu0 0.0
      %1245 = vmatpush1.msra.mxu0 0.0
      %1246 = vmatprep.subr.mxu0 0.0
      %1247 = vmatpush1.msra.mxu0 0.0
      %1248 = vmatprep.subr.mxu0 0.0
      %1249 = vmatpush1.msra.mxu0 0.0
      %1250 = vmatprep.subr.mxu0 0.0
      %1251 = vmatpush1.msra.mxu0 0.0
      %1252 = vmatprep.subr.mxu0 0.0
      %1253 = vmatpush1.msra.mxu0 0.0
      %1254 = vmatprep.subr.mxu0 0.0
      %1255 = vmatpush1.msra.mxu0 0.0
      %1256 = vmatprep.subr.mxu0 0.0
      %1257 = vmatpush1.msra.mxu0 0.0
      %1258 = vmatprep.subr.mxu0 0.0
      %1259 = vmatpush1.msra.mxu0 0.0
      %1260 = vmatprep.subr.mxu0 0.0
      %1261 = vmatpush1.msra.mxu0 0.0
      %1262 = vmatprep.subr.mxu0 0.0
      %1263 = vmatpush1.msra.mxu0 0.0
      %1264 = vmatprep.subr.mxu0 0.0
      %1265 = vmatpush1.msra.mxu0 0.0
      %1266 = vmatprep.subr.mxu0 0.0
      %1267 = vmatpush1.msra.mxu0 0.0
      %1268 = vmatprep.subr.mxu0 0.0
      %1269 = vmatpush1.msra.mxu0 0.0
      %1270 = vmatprep.subr.mxu0 0.0
      %1271 = vmatpush1.msra.mxu0 0.0
      %1272 = vmatprep.subr.mxu0 0.0
      %1273 = vmatpush1.msra.mxu0 0.0
      %1274 = vmatprep.subr.mxu0 0.0
      %1275 = vmatpush1.msra.mxu0 0.0
      %1276 = vmatprep.subr.mxu0 0.0
      %1277 = vmatpush1.msra.mxu0 0.0
      %1278 = vmatprep.subr.mxu0 0.0
      %1279 = vmatpush1.msra.mxu0 0.0
      %1280 = vmatprep.subr.mxu0 0.0
      %1281 = vmatpush1.msra.mxu0 0.0
      %1282 = vmatprep.subr.mxu0 0.0
      %1283 = vmatpush1.msra.mxu0 0.0
      %1284 = vmatprep.subr.mxu0 0.0
      %1285 = vmatpush1.msra.mxu0 0.0
      %1286 = vmatprep.mubr.f32.mxu0 0.0
      %1287 = vmatmul.mubr.f32.gmra.mrb[0].mxu0 %v1140
      %v1288 = vpop.f32.mrb[0].mxu0
      %v1289 = vadd.f32 %v1131, %v1288
      %v1290 = vpop.f32.mrb[0].mxu0
      %v1291 = vadd.f32 %v1131, %v1290
      %1292 = vmatprep.mubr.f32.mxu0 0.0
      %1293 = vmatmul.mubr.f32.gmra.mrb[0].mxu0 %v1143
      %v1294 = vpop.f32.mrb[0].mxu0
      %v1295 = vadd.f32 %v1136, %v1294
      %v1296 = vpop.f32.mrb[0].mxu0
      %v1297 = vadd.f32 %v1136, %v1296
      %1298 = vdwg.mxu0
      %v1299 = vmax.f32 %v1212, 0.0
      %v1300 = vmax.f32 %v1214, 0.0
      %v1301 = vmax.f32 %v1289, 0.0
      %v1302 = vmax.f32 %v1291, 0.0
      %v1303 = vmax.f32 %v1218, 0.0
      %v1304 = vmax.f32 %v1220, 0.0
      %v1305 = vmax.f32 %v1295, 0.0
      %v1306 = vmax.f32 %v1297, 0.0
      %1307 = vrot.lane.b32.xlu0 %v1299, 17
      %v1308 = vpop.permute.xlu0 %1307
      %1309 = vrot.lane.b32.xlu0 %v1303, 17
      %v1310 = vpop.permute.xlu0 %1309
      %1311 = vrot.lane.b32.xlu0 %v1300, 17
      %v1312 = vpop.permute.xlu0 %1311
      %1313 = vrot.lane.b32.xlu0 %v1304, 17
      %v1314 = vpop.permute.xlu0 %1313
      %1315 = vrot.lane.b32.xlu0 %v1301, 17
      %v1316 = vpop.permute.xlu0 %1315
      %1317 = vrot.lane.b32.xlu0 %v1305, 17
      %v1318 = vpop.permute.xlu0 %1317
      %1319 = vrot.lane.b32.xlu0 %v1302, 17
      %v1320 = vpop.permute.xlu0 %1319
      %1321 = vrot.lane.b32.xlu0 %v1306, 17
      %v1322 = vpop.permute.xlu0 %1321
      %v1323 = vsel %vm627, %v1316, %v1320
      %v1324 = vsel %vm627, %v1318, %v1322
      %v1325 = vsel %vm627, %v1312, %v1316
      %v1326 = vsel %vm627, %v1314, %v1318
      %v1327 = vsel %vm627, %v1308, %v1312
      %v1328 = vsel %vm627, %v1310, %v1314
      %v1329 = vsel %vm627, %v1320, %v1308
      %v1330 = vsel %vm627, %v1322, %v1310
      %v1331 = vmul.f32 %v1329, %v635
      %v1332 = vmul.f32 %v1327, %v639
      %v1333 = vmul.f32 %v1325, %v643
      %v1334 = vmul.f32 %v1323, %v647
      %v1335 = vmul.f32 %v1330, %v635
      %v1336 = vmul.f32 %v1328, %v639
      %v1337 = vmul.f32 %v1326, %v643
      %v1338 = vmul.f32 %v1324, %v647
      %1339 = vst [vmem:[#allocation3] sm:$0xff] %v1331
      %1340 = vst [vmem:[#allocation3 + $0x8] sm:$0xff] %v1332
      %1341 = vst [vmem:[#allocation3 + $0x10] sm:$0xff] %v1333
      %1342 = vst [vmem:[#allocation3 + $0x18] sm:$0xff] %v1334
      %1343 = vst [vmem:[#allocation3 + $0x20] sm:$0xff] %v1335
      %1344 = vst [vmem:[#allocation3 + $0x28] sm:$0xff] %v1336
      %1345 = vst [vmem:[#allocation3 + $0x30] sm:$0xff] %v1337
      %1346 = vst [vmem:[#allocation3 + $0x38] sm:$0xff] %v1338
      %1347 = vrot.lane.b32.xlu0 %v1299, 16
      %v1348 = vpop.permute.xlu0 %1347
      %1349 = vrot.lane.b32.xlu0 %v1303, 16
      %v1350 = vpop.permute.xlu0 %1349
      %1351 = vrot.lane.b32.xlu0 %v1300, 16
      %v1352 = vpop.permute.xlu0 %1351
      %1353 = vrot.lane.b32.xlu0 %v1304, 16
      %v1354 = vpop.permute.xlu0 %1353
      %1355 = vrot.lane.b32.xlu0 %v1301, 16
      %v1356 = vpop.permute.xlu0 %1355
      %1357 = vrot.lane.b32.xlu0 %v1305, 16
      %v1358 = vpop.permute.xlu0 %1357
      %1359 = vrot.lane.b32.xlu0 %v1302, 16
      %v1360 = vpop.permute.xlu0 %1359
      %1361 = vrot.lane.b32.xlu0 %v1306, 16
      %v1362 = vpop.permute.xlu0 %1361
      %v1363 = vsel %vm664, %v1356, %v1360
      %v1364 = vsel %vm664, %v1358, %v1362
      %v1365 = vsel %vm664, %v1352, %v1356
      %v1366 = vsel %vm664, %v1354, %v1358
      %v1367 = vsel %vm664, %v1348, %v1352
      %v1368 = vsel %vm664, %v1350, %v1354
      %v1369 = vsel %vm664, %v1360, %v1348
      %v1370 = vsel %vm664, %v1362, %v1350
      %v1371 = vmul.f32 %v1369, %v672
      %v1372 = vmul.f32 %v1367, %v676
      %v1373 = vmul.f32 %v1365, %v680
      %v1374 = vmul.f32 %v1363, %v684
      %v1375 = vmul.f32 %v1370, %v672
      %v1376 = vmul.f32 %v1368, %v676
      %v1377 = vmul.f32 %v1366, %v680
      %v1378 = vmul.f32 %v1364, %v684
      %1379 = vst [vmem:[#allocation3 + $0x40] sm:$0xff] %v1371
      %1380 = vst [vmem:[#allocation3 + $0x48] sm:$0xff] %v1372
      %1381 = vst [vmem:[#allocation3 + $0x50] sm:$0xff] %v1373
      %1382 = vst [vmem:[#allocation3 + $0x58] sm:$0xff] %v1374
      %1383 = vst [vmem:[#allocation3 + $0x60] sm:$0xff] %v1375
      %1384 = vst [vmem:[#allocation3 + $0x68] sm:$0xff] %v1376
      %1385 = vst [vmem:[#allocation3 + $0x70] sm:$0xff] %v1377
      %1386 = vst [vmem:[#allocation3 + $0x78] sm:$0xff] %v1378
      %1387 = vrot.lane.b32.xlu0 %v1299, 15
      %v1388 = vpop.permute.xlu0 %1387
      %1389 = vrot.lane.b32.xlu0 %v1303, 15
      %v1390 = vpop.permute.xlu0 %1389
      %1391 = vrot.lane.b32.xlu0 %v1300, 15
      %v1392 = vpop.permute.xlu0 %1391
      %1393 = vrot.lane.b32.xlu0 %v1304, 15
      %v1394 = vpop.permute.xlu0 %1393
      %1395 = vrot.lane.b32.xlu0 %v1301, 15
      %v1396 = vpop.permute.xlu0 %1395
      %1397 = vrot.lane.b32.xlu0 %v1305, 15
      %v1398 = vpop.permute.xlu0 %1397
      %1399 = vrot.lane.b32.xlu0 %v1302, 15
      %v1400 = vpop.permute.xlu0 %1399
      %1401 = vrot.lane.b32.xlu0 %v1306, 15
      %v1402 = vpop.permute.xlu0 %1401
      %v1403 = vsel %vm701, %v1396, %v1400
      %v1404 = vsel %vm701, %v1398, %v1402
      %v1405 = vsel %vm701, %v1392, %v1396
      %v1406 = vsel %vm701, %v1394, %v1398
      %v1407 = vsel %vm701, %v1388, %v1392
      %v1408 = vsel %vm701, %v1390, %v1394
      %v1409 = vsel %vm701, %v1400, %v1388
      %v1410 = vsel %vm701, %v1402, %v1390
      %v1411 = vmul.f32 %v1409, %v709
      %v1412 = vmul.f32 %v1407, %v713
      %v1413 = vmul.f32 %v1405, %v717
      %v1414 = vmul.f32 %v1403, %v721
      %v1415 = vmul.f32 %v1410, %v709
      %v1416 = vmul.f32 %v1408, %v713
      %v1417 = vmul.f32 %v1406, %v717
      %v1418 = vmul.f32 %v1404, %v721
      %1419 = vst [vmem:[#allocation3 + $0x80] sm:$0xff] %v1411
      %1420 = vst [vmem:[#allocation3 + $0x88] sm:$0xff] %v1412
      %1421 = vst [vmem:[#allocation3 + $0x90] sm:$0xff] %v1413
      %1422 = vst [vmem:[#allocation3 + $0x98] sm:$0xff] %v1414
      %1423 = vst [vmem:[#allocation3 + $0xa0] sm:$0xff] %v1415
      %1424 = vst [vmem:[#allocation3 + $0xa8] sm:$0xff] %v1416
      %1425 = vst [vmem:[#allocation3 + $0xb0] sm:$0xff] %v1417
      %1426 = vst [vmem:[#allocation3 + $0xb8] sm:$0xff] %v1418
      %1427 = vrot.lane.b32.xlu0 %v1299, 1
      %v1428 = vpop.permute.xlu0 %1427
      %1429 = vrot.lane.b32.xlu0 %v1303, 1
      %v1430 = vpop.permute.xlu0 %1429
      %1431 = vrot.lane.b32.xlu0 %v1300, 1
      %v1432 = vpop.permute.xlu0 %1431
      %1433 = vrot.lane.b32.xlu0 %v1304, 1
      %v1434 = vpop.permute.xlu0 %1433
      %1435 = vrot.lane.b32.xlu0 %v1301, 1
      %v1436 = vpop.permute.xlu0 %1435
      %1437 = vrot.lane.b32.xlu0 %v1305, 1
      %v1438 = vpop.permute.xlu0 %1437
      %1439 = vrot.lane.b32.xlu0 %v1302, 1
      %v1440 = vpop.permute.xlu0 %1439
      %1441 = vrot.lane.b32.xlu0 %v1306, 1
      %v1442 = vpop.permute.xlu0 %1441
      %v1443 = vsel %vm738, %v1436, %v1440
      %v1444 = vsel %vm738, %v1438, %v1442
      %v1445 = vsel %vm738, %v1432, %v1436
      %v1446 = vsel %vm738, %v1434, %v1438
      %v1447 = vsel %vm738, %v1428, %v1432
      %v1448 = vsel %vm738, %v1430, %v1434
      %v1449 = vsel %vm738, %v1440, %v1428
      %v1450 = vsel %vm738, %v1442, %v1430
      %v1451 = vmul.f32 %v1449, %v746
      %v1452 = vmul.f32 %v1447, %v750
      %v1453 = vmul.f32 %v1445, %v754
      %v1454 = vmul.f32 %v1443, %v758
      %v1455 = vmul.f32 %v1450, %v746
      %v1456 = vmul.f32 %v1448, %v750
      %v1457 = vmul.f32 %v1446, %v754
      %v1458 = vmul.f32 %v1444, %v758
      %1459 = vst [vmem:[#allocation3 + $0xc0] sm:$0xff] %v1451
      %1460 = vst [vmem:[#allocation3 + $0xc8] sm:$0xff] %v1452
      %1461 = vst [vmem:[#allocation3 + $0xd0] sm:$0xff] %v1453
      %1462 = vst [vmem:[#allocation3 + $0xd8] sm:$0xff] %v1454
      %1463 = vst [vmem:[#allocation3 + $0xe0] sm:$0xff] %v1455
      %1464 = vst [vmem:[#allocation3 + $0xe8] sm:$0xff] %v1456
      %1465 = vst [vmem:[#allocation3 + $0xf0] sm:$0xff] %v1457
      %1466 = vst [vmem:[#allocation3 + $0xf8] sm:$0xff] %v1458
      %1467 = vst [vmem:[#allocation3 + $0x100] sm:$0xff] %v1299
      %1468 = vst [vmem:[#allocation3 + $0x108] sm:$0xff] %v1300
      %1469 = vst [vmem:[#allocation3 + $0x110] sm:$0xff] %v1301
      %1470 = vst [vmem:[#allocation3 + $0x118] sm:$0xff] %v1302
      %1471 = vst [vmem:[#allocation3 + $0x120] sm:$0xff] %v1303
      %1472 = vst [vmem:[#allocation3 + $0x128] sm:$0xff] %v1304
      %1473 = vst [vmem:[#allocation3 + $0x130] sm:$0xff] %v1305
      %1474 = vst [vmem:[#allocation3 + $0x138] sm:$0xff] %v1306
      %1475 = vrot.lane.b32.xlu0 %v1299, 127
      %v1476 = vpop.permute.xlu0 %1475
      %1477 = vrot.lane.b32.xlu0 %v1303, 127
      %v1478 = vpop.permute.xlu0 %1477
      %1479 = vrot.lane.b32.xlu0 %v1300, 127
      %v1480 = vpop.permute.xlu0 %1479
      %1481 = vrot.lane.b32.xlu0 %v1304, 127
      %v1482 = vpop.permute.xlu0 %1481
      %1483 = vrot.lane.b32.xlu0 %v1301, 127
      %v1484 = vpop.permute.xlu0 %1483
      %1485 = vrot.lane.b32.xlu0 %v1305, 127
      %v1486 = vpop.permute.xlu0 %1485
      %1487 = vrot.lane.b32.xlu0 %v1302, 127
      %v1488 = vpop.permute.xlu0 %1487
      %1489 = vrot.lane.b32.xlu0 %v1306, 127
      %v1490 = vpop.permute.xlu0 %1489
      %v1491 = vsel %vm779, %v1484, %v1488
      %v1492 = vsel %vm779, %v1486, %v1490
      %v1493 = vsel %vm779, %v1480, %v1484
      %v1494 = vsel %vm779, %v1482, %v1486
      %v1495 = vsel %vm779, %v1476, %v1480
      %v1496 = vsel %vm779, %v1478, %v1482
      %v1497 = vsel %vm779, %v1488, %v1476
      %v1498 = vsel %vm779, %v1490, %v1478
      %v1499 = vmul.f32 %v1495, %v787
      %v1500 = vmul.f32 %v1493, %v791
      %v1501 = vmul.f32 %v1491, %v795
      %v1502 = vmul.f32 %v1497, %v799
      %v1503 = vmul.f32 %v1496, %v787
      %v1504 = vmul.f32 %v1494, %v791
      %v1505 = vmul.f32 %v1492, %v795
      %v1506 = vmul.f32 %v1498, %v799
      %1507 = vst [vmem:[#allocation3 + $0x140] sm:$0xff] %v1499
      %1508 = vst [vmem:[#allocation3 + $0x148] sm:$0xff] %v1500
      %1509 = vst [vmem:[#allocation3 + $0x150] sm:$0xff] %v1501
      %1510 = vst [vmem:[#allocation3 + $0x158] sm:$0xff] %v1502
      %1511 = vst [vmem:[#allocation3 + $0x160] sm:$0xff] %v1503
      %1512 = vst [vmem:[#allocation3 + $0x168] sm:$0xff] %v1504
      %1513 = vst [vmem:[#allocation3 + $0x170] sm:$0xff] %v1505
      %1514 = vst [vmem:[#allocation3 + $0x178] sm:$0xff] %v1506
      %1515 = vrot.lane.b32.xlu0 %v1299, 113
      %v1516 = vpop.permute.xlu0 %1515
      %1517 = vrot.lane.b32.xlu0 %v1303, 113
      %v1518 = vpop.permute.xlu0 %1517
      %1519 = vrot.lane.b32.xlu0 %v1300, 113
      %v1520 = vpop.permute.xlu0 %1519
      %1521 = vrot.lane.b32.xlu0 %v1304, 113
      %v1522 = vpop.permute.xlu0 %1521
      %1523 = vrot.lane.b32.xlu0 %v1301, 113
      %v1524 = vpop.permute.xlu0 %1523
      %1525 = vrot.lane.b32.xlu0 %v1305, 113
      %v1526 = vpop.permute.xlu0 %1525
      %1527 = vrot.lane.b32.xlu0 %v1302, 113
      %v1528 = vpop.permute.xlu0 %1527
      %1529 = vrot.lane.b32.xlu0 %v1306, 113
      %v1530 = vpop.permute.xlu0 %1529
      %v1531 = vsel %vm816, %v1524, %v1528
      %v1532 = vsel %vm816, %v1526, %v1530
      %v1533 = vsel %vm816, %v1520, %v1524
      %v1534 = vsel %vm816, %v1522, %v1526
      %v1535 = vsel %vm816, %v1516, %v1520
      %v1536 = vsel %vm816, %v1518, %v1522
      %v1537 = vsel %vm816, %v1528, %v1516
      %v1538 = vsel %vm816, %v1530, %v1518
      %v1539 = vmul.f32 %v1535, %v824
      %v1540 = vmul.f32 %v1533, %v828
      %v1541 = vmul.f32 %v1531, %v832
      %v1542 = vmul.f32 %v1537, %v836
      %v1543 = vmul.f32 %v1536, %v824
      %v1544 = vmul.f32 %v1534, %v828
      %v1545 = vmul.f32 %v1532, %v832
      %v1546 = vmul.f32 %v1538, %v836
      %1547 = vst [vmem:[#allocation3 + $0x180] sm:$0xff] %v1539
      %1548 = vst [vmem:[#allocation3 + $0x188] sm:$0xff] %v1540
      %1549 = vst [vmem:[#allocation3 + $0x190] sm:$0xff] %v1541
      %1550 = vst [vmem:[#allocation3 + $0x198] sm:$0xff] %v1542
      %1551 = vst [vmem:[#allocation3 + $0x1a0] sm:$0xff] %v1543
      %1552 = vst [vmem:[#allocation3 + $0x1a8] sm:$0xff] %v1544
      %1553 = vst [vmem:[#allocation3 + $0x1b0] sm:$0xff] %v1545
      %1554 = vst [vmem:[#allocation3 + $0x1b8] sm:$0xff] %v1546
      %1555 = vrot.lane.b32.xlu0 %v1299, 112
      %v1556 = vpop.permute.xlu0 %1555
      %1557 = vrot.lane.b32.xlu0 %v1303, 112
      %v1558 = vpop.permute.xlu0 %1557
      %1559 = vrot.lane.b32.xlu0 %v1300, 112
      %v1560 = vpop.permute.xlu0 %1559
      %1561 = vrot.lane.b32.xlu0 %v1304, 112
      %v1562 = vpop.permute.xlu0 %1561
      %1563 = vrot.lane.b32.xlu0 %v1301, 112
      %v1564 = vpop.permute.xlu0 %1563
      %1565 = vrot.lane.b32.xlu0 %v1305, 112
      %v1566 = vpop.permute.xlu0 %1565
      %1567 = vrot.lane.b32.xlu0 %v1302, 112
      %v1568 = vpop.permute.xlu0 %1567
      %1569 = vrot.lane.b32.xlu0 %v1306, 112
      %v1570 = vpop.permute.xlu0 %1569
      %v1571 = vsel %vm853, %v1564, %v1568
      %v1572 = vsel %vm853, %v1566, %v1570
      %v1573 = vsel %vm853, %v1560, %v1564
      %v1574 = vsel %vm853, %v1562, %v1566
      %v1575 = vsel %vm853, %v1556, %v1560
      %v1576 = vsel %vm853, %v1558, %v1562
      %v1577 = vsel %vm853, %v1568, %v1556
      %v1578 = vsel %vm853, %v1570, %v1558
      %v1579 = vmul.f32 %v1575, %v861
      %v1580 = vmul.f32 %v1573, %v865
      %v1581 = vmul.f32 %v1571, %v869
      %v1582 = vmul.f32 %v1577, %v873
      %v1583 = vmul.f32 %v1576, %v861
      %v1584 = vmul.f32 %v1574, %v865
      %v1585 = vmul.f32 %v1572, %v869
      %v1586 = vmul.f32 %v1578, %v873
      %1587 = vst [vmem:[#allocation3 + $0x1c0] sm:$0xff] %v1579
      %1588 = vst [vmem:[#allocation3 + $0x1c8] sm:$0xff] %v1580
      %1589 = vst [vmem:[#allocation3 + $0x1d0] sm:$0xff] %v1581
      %1590 = vst [vmem:[#allocation3 + $0x1d8] sm:$0xff] %v1582
      %1591 = vst [vmem:[#allocation3 + $0x1e0] sm:$0xff] %v1583
      %1592 = vst [vmem:[#allocation3 + $0x1e8] sm:$0xff] %v1584
      %1593 = vst [vmem:[#allocation3 + $0x1f0] sm:$0xff] %v1585
      %1594 = vst [vmem:[#allocation3 + $0x1f8] sm:$0xff] %v1586
      %1595 = vrot.lane.b32.xlu0 %v1299, 111
      %v1596 = vpop.permute.xlu0 %1595
      %1597 = vrot.lane.b32.xlu0 %v1303, 111
      %v1598 = vpop.permute.xlu0 %1597
      %1599 = vrot.lane.b32.xlu0 %v1300, 111
      %v1600 = vpop.permute.xlu0 %1599
      %1601 = vrot.lane.b32.xlu0 %v1304, 111
      %v1602 = vpop.permute.xlu0 %1601
      %1603 = vrot.lane.b32.xlu0 %v1301, 111
      %v1604 = vpop.permute.xlu0 %1603
      %1605 = vrot.lane.b32.xlu0 %v1305, 111
      %v1606 = vpop.permute.xlu0 %1605
      %1607 = vrot.lane.b32.xlu0 %v1302, 111
      %v1608 = vpop.permute.xlu0 %1607
      %1609 = vrot.lane.b32.xlu0 %v1306, 111
      %v1610 = vpop.permute.xlu0 %1609
      %v1611 = vsel %vm890, %v1604, %v1608
      %v1612 = vsel %vm890, %v1606, %v1610
      %v1613 = vsel %vm890, %v1600, %v1604
      %v1614 = vsel %vm890, %v1602, %v1606
      %v1615 = vsel %vm890, %v1596, %v1600
      %v1616 = vsel %vm890, %v1598, %v1602
      %v1617 = vsel %vm890, %v1608, %v1596
      %v1618 = vsel %vm890, %v1610, %v1598
      %v1619 = vmul.f32 %v1615, %v898
      %v1620 = vmul.f32 %v1613, %v902
      %v1621 = vmul.f32 %v1611, %v906
      %v1622 = vmul.f32 %v1617, %v910
      %v1623 = vmul.f32 %v1616, %v898
      %v1624 = vmul.f32 %v1614, %v902
      %v1625 = vmul.f32 %v1612, %v906
      %v1626 = vmul.f32 %v1618, %v910
      %1627 = vst [vmem:[#allocation3 + $0x200] sm:$0xff] %v1619
      %1628 = vst [vmem:[#allocation3 + $0x208] sm:$0xff] %v1620
      %1629 = vst [vmem:[#allocation3 + $0x210] sm:$0xff] %v1621
      %1630 = vst [vmem:[#allocation3 + $0x218] sm:$0xff] %v1622
      %1631 = vst [vmem:[#allocation3 + $0x220] sm:$0xff] %v1623
      %1632 = vst [vmem:[#allocation3 + $0x228] sm:$0xff] %v1624
      %1633 = vst [vmem:[#allocation3 + $0x230] sm:$0xff] %v1625
      %1634 = vst [vmem:[#allocation3 + $0x238] sm:$0xff] %v1626
      %v1635 = vld [vmem:[%s4 + $0x10] sm:$0xff]
      %v1636 = vld [vmem:[%s4 + $0x18] sm:$0xff]
      %v1637 = vld [vmem:[#allocation3] sm:$0xff]
      %v1638 = vld [vmem:[#allocation3 + $0x8] sm:$0xff]
      %v1639 = vld [vmem:[#allocation3 + $0x10] sm:$0xff]
      %v1640 = vld [vmem:[#allocation3 + $0x18] sm:$0xff]
      %v1641 = vld [vmem:[#allocation3 + $0x20] sm:$0xff]
      %v1642 = vld [vmem:[#allocation3 + $0x28] sm:$0xff]
      %v1643 = vld [vmem:[#allocation3 + $0x30] sm:$0xff]
      %v1644 = vld [vmem:[#allocation3 + $0x38] sm:$0xff]
      %v1645 = vld [vmem:[#allocation3 + $0x40] sm:$0xff]
      %v1646 = vld [vmem:[#allocation3 + $0x48] sm:$0xff]
      %v1647 = vld [vmem:[#allocation3 + $0x50] sm:$0xff]
      %v1648 = vld [vmem:[#allocation3 + $0x58] sm:$0xff]
      %v1649 = vld [vmem:[#allocation3 + $0x60] sm:$0xff]
      %v1650 = vld [vmem:[#allocation3 + $0x68] sm:$0xff]
      %v1651 = vld [vmem:[#allocation3 + $0x70] sm:$0xff]
      %v1652 = vld [vmem:[#allocation3 + $0x78] sm:$0xff]
      %v1653 = vld [vmem:[#allocation3 + $0x80] sm:$0xff]
      %v1654 = vld [vmem:[#allocation3 + $0x88] sm:$0xff]
      %v1655 = vld [vmem:[#allocation3 + $0x90] sm:$0xff]
      %v1656 = vld [vmem:[#allocation3 + $0x98] sm:$0xff]
      %v1657 = vld [vmem:[#allocation3 + $0xa0] sm:$0xff]
      %v1658 = vld [vmem:[#allocation3 + $0xa8] sm:$0xff]
      %v1659 = vld [vmem:[#allocation3 + $0xb0] sm:$0xff]
      %v1660 = vld [vmem:[#allocation3 + $0xb8] sm:$0xff]
      %v1661 = vld [vmem:[#allocation3 + $0xc0] sm:$0xff]
      %v1662 = vld [vmem:[#allocation3 + $0xc8] sm:$0xff]
      %v1663 = vld [vmem:[#allocation3 + $0xd0] sm:$0xff]
      %v1664 = vld [vmem:[#allocation3 + $0xd8] sm:$0xff]
      %v1665 = vld [vmem:[#allocation3 + $0xe0] sm:$0xff]
      %v1666 = vld [vmem:[#allocation3 + $0xe8] sm:$0xff]
      %v1667 = vld [vmem:[#allocation3 + $0xf0] sm:$0xff]
      %v1668 = vld [vmem:[#allocation3 + $0xf8] sm:$0xff]
      %v1669 = vld [vmem:[#allocation3 + $0x100] sm:$0xff]
      %v1670 = vld [vmem:[#allocation3 + $0x108] sm:$0xff]
      %v1671 = vld [vmem:[#allocation3 + $0x110] sm:$0xff]
      %v1672 = vld [vmem:[#allocation3 + $0x118] sm:$0xff]
      %v1673 = vld [vmem:[#allocation3 + $0x120] sm:$0xff]
      %v1674 = vld [vmem:[#allocation3 + $0x128] sm:$0xff]
      %v1675 = vld [vmem:[#allocation3 + $0x130] sm:$0xff]
      %v1676 = vld [vmem:[#allocation3 + $0x138] sm:$0xff]
      %v1677 = vld [vmem:[#allocation3 + $0x140] sm:$0xff]
      %v1678 = vld [vmem:[#allocation3 + $0x148] sm:$0xff]
      %v1679 = vld [vmem:[#allocation3 + $0x150] sm:$0xff]
      %v1680 = vld [vmem:[#allocation3 + $0x158] sm:$0xff]
      %v1681 = vld [vmem:[#allocation3 + $0x160] sm:$0xff]
      %v1682 = vld [vmem:[#allocation3 + $0x168] sm:$0xff]
      %v1683 = vld [vmem:[#allocation3 + $0x170] sm:$0xff]
      %v1684 = vld [vmem:[#allocation3 + $0x178] sm:$0xff]
      %v1685 = vld [vmem:[#allocation3 + $0x180] sm:$0xff]
      %v1686 = vld [vmem:[#allocation3 + $0x188] sm:$0xff]
      %v1687 = vld [vmem:[#allocation3 + $0x190] sm:$0xff]
      %v1688 = vld [vmem:[#allocation3 + $0x198] sm:$0xff]
      %v1689 = vld [vmem:[#allocation3 + $0x1a0] sm:$0xff]
      %v1690 = vld [vmem:[#allocation3 + $0x1a8] sm:$0xff]
      %v1691 = vld [vmem:[#allocation3 + $0x1b0] sm:$0xff]
      %v1692 = vld [vmem:[#allocation3 + $0x1b8] sm:$0xff]
      %v1693 = vld [vmem:[#allocation3 + $0x1c0] sm:$0xff]
      %v1694 = vld [vmem:[#allocation3 + $0x1c8] sm:$0xff]
      %v1695 = vld [vmem:[#allocation3 + $0x1d0] sm:$0xff]
      %v1696 = vld [vmem:[#allocation3 + $0x1d8] sm:$0xff]
      %v1697 = vld [vmem:[#allocation3 + $0x1e0] sm:$0xff]
      %v1698 = vld [vmem:[#allocation3 + $0x1e8] sm:$0xff]
      %v1699 = vld [vmem:[#allocation3 + $0x1f0] sm:$0xff]
      %v1700 = vld [vmem:[#allocation3 + $0x1f8] sm:$0xff]
      %v1701 = vld [vmem:[#allocation3 + $0x200] sm:$0xff]
      %v1702 = vld [vmem:[#allocation3 + $0x208] sm:$0xff]
      %v1703 = vld [vmem:[#allocation3 + $0x210] sm:$0xff]
      %v1704 = vld [vmem:[#allocation3 + $0x218] sm:$0xff]
      %v1705 = vld [vmem:[#allocation3 + $0x220] sm:$0xff]
      %v1706 = vld [vmem:[#allocation3 + $0x228] sm:$0xff]
      %v1707 = vld [vmem:[#allocation3 + $0x230] sm:$0xff]
      %v1708 = vld [vmem:[#allocation3 + $0x238] sm:$0xff]
      %v1709 = vld [vmem:[%s5 + $0x28] sm:$0xff]
      %1711 = vset.pattern.permute.xlu0 0
      %1712 = vperm.xlu0 %1711, %v1709
      %v1713 = vpop.permute.xlu0 %1712
      %v1716 = vsel %vm1138, %v1636, 0
      %1718 = vmatprep.subr.mxu0 %v1638
      %1719 = vmatpush1.msra.mxu0 %v1637
      %1720 = vmatprep.subr.mxu0 %v1642
      %1721 = vmatpush1.msra.mxu0 %v1641
      %1722 = vmatprep.subr.mxu0 %v1646
      %1723 = vmatpush1.msra.mxu0 %v1645
      %1724 = vmatprep.subr.mxu0 %v1650
      %1725 = vmatpush1.msra.mxu0 %v1649
      %1726 = vmatprep.subr.mxu0 %v1654
      %1727 = vmatpush1.msra.mxu0 %v1653
      %1728 = vmatprep.subr.mxu0 %v1658
      %1729 = vmatpush1.msra.mxu0 %v1657
      %1730 = vmatprep.subr.mxu0 %v1662
      %1731 = vmatpush1.msra.mxu0 %v1661
      %1732 = vmatprep.subr.mxu0 %v1666
      %1733 = vmatpush1.msra.mxu0 %v1665
      %1734 = vmatprep.subr.mxu0 %v1670
      %1735 = vmatpush1.msra.mxu0 %v1669
      %1736 = vmatprep.subr.mxu0 %v1674
      %1737 = vmatpush1.msra.mxu0 %v1673
      %1738 = vmatprep.subr.mxu0 %v1678
      %1739 = vmatpush1.msra.mxu0 %v1677
      %1740 = vmatprep.subr.mxu0 %v1682
      %1741 = vmatpush1.msra.mxu0 %v1681
      %1742 = vmatprep.subr.mxu0 %v1686
      %1743 = vmatpush1.msra.mxu0 %v1685
      %1744 = vmatprep.subr.mxu0 %v1690
      %1745 = vmatpush1.msra.mxu0 %v1689
      %1746 = vmatprep.subr.mxu0 %v1694
      %1747 = vmatpush1.msra.mxu0 %v1693
      %1748 = vmatprep.subr.mxu0 %v1698
      %1749 = vmatpush1.msra.mxu0 %v1697
      %1750 = vmatprep.subr.mxu0 %v1702
      %1751 = vmatpush1.msra.mxu0 %v1701
      %1752 = vmatprep.subr.mxu0 %v1706
      %1753 = vmatpush1.msra.mxu0 %v1705
      %1754 = vmatprep.subr.mxu0 0.0
      %1755 = vmatpush1.msra.mxu0 0.0
      %1756 = vmatprep.subr.mxu0 0.0
      %1757 = vmatpush1.msra.mxu0 0.0
      %1758 = vmatprep.subr.mxu0 0.0
      %1759 = vmatpush1.msra.mxu0 0.0
      %1760 = vmatprep.subr.mxu0 0.0
      %1761 = vmatpush1.msra.mxu0 0.0
      %1762 = vmatprep.subr.mxu0 0.0
      %1763 = vmatpush1.msra.mxu0 0.0
      %1764 = vmatprep.subr.mxu0 0.0
      %1765 = vmatpush1.msra.mxu0 0.0
      %1766 = vmatprep.subr.mxu0 0.0
      %1767 = vmatpush1.msra.mxu0 0.0
      %1768 = vmatprep.subr.mxu0 0.0
      %1769 = vmatpush1.msra.mxu0 0.0
      %1770 = vmatprep.subr.mxu0 0.0
      %1771 = vmatpush1.msra.mxu0 0.0
      %1772 = vmatprep.subr.mxu0 0.0
      %1773 = vmatpush1.msra.mxu0 0.0
      %1774 = vmatprep.subr.mxu0 0.0
      %1775 = vmatpush1.msra.mxu0 0.0
      %1776 = vmatprep.subr.mxu0 0.0
      %1777 = vmatpush1.msra.mxu0 0.0
      %1778 = vmatprep.subr.mxu0 0.0
      %1779 = vmatpush1.msra.mxu0 0.0
      %1780 = vmatprep.subr.mxu0 0.0
      %1781 = vmatpush1.msra.mxu0 0.0
      %1782 = vmatprep.mubr.f32.mxu0 %v1716
      %1783 = vmatmul.mubr.f32.gmra.mrb[0].mxu0 %v1635
      %v1784 = vpop.f32.mrb[0].mxu0
      %v1785 = vadd.f32 %v1713, %v1784
      %v1786 = vpop.f32.mrb[0].mxu0
      %v1787 = vadd.f32 %v1713, %v1786
      %1788 = vdwg.mxu0
      %1789 = vmatprep.subr.mxu0 %v1640
      %1790 = vmatpush1.msra.mxu0 %v1639
      %1791 = vmatprep.subr.mxu0 %v1644
      %1792 = vmatpush1.msra.mxu0 %v1643
      %1793 = vmatprep.subr.mxu0 %v1648
      %1794 = vmatpush1.msra.mxu0 %v1647
      %1795 = vmatprep.subr.mxu0 %v1652
      %1796 = vmatpush1.msra.mxu0 %v1651
      %1797 = vmatprep.subr.mxu0 %v1656
      %1798 = vmatpush1.msra.mxu0 %v1655
      %1799 = vmatprep.subr.mxu0 %v1660
      %1800 = vmatpush1.msra.mxu0 %v1659
      %1801 = vmatprep.subr.mxu0 %v1664
      %1802 = vmatpush1.msra.mxu0 %v1663
      %1803 = vmatprep.subr.mxu0 %v1668
      %1804 = vmatpush1.msra.mxu0 %v1667
      %1805 = vmatprep.subr.mxu0 %v1672
      %1806 = vmatpush1.msra.mxu0 %v1671
      %1807 = vmatprep.subr.mxu0 %v1676
      %1808 = vmatpush1.msra.mxu0 %v1675
      %1809 = vmatprep.subr.mxu0 %v1680
      %1810 = vmatpush1.msra.mxu0 %v1679
      %1811 = vmatprep.subr.mxu0 %v1684
      %1812 = vmatpush1.msra.mxu0 %v1683
      %1813 = vmatprep.subr.mxu0 %v1688
      %1814 = vmatpush1.msra.mxu0 %v1687
      %1815 = vmatprep.subr.mxu0 %v1692
      %1816 = vmatpush1.msra.mxu0 %v1691
      %1817 = vmatprep.subr.mxu0 %v1696
      %1818 = vmatpush1.msra.mxu0 %v1695
      %1819 = vmatprep.subr.mxu0 %v1700
      %1820 = vmatpush1.msra.mxu0 %v1699
      %1821 = vmatprep.subr.mxu0 %v1704
      %1822 = vmatpush1.msra.mxu0 %v1703
      %1823 = vmatprep.subr.mxu0 %v1708
      %1824 = vmatpush1.msra.mxu0 %v1707
      %1825 = vmatprep.subr.mxu0 0.0
      %1826 = vmatpush1.msra.mxu0 0.0
      %1827 = vmatprep.subr.mxu0 0.0
      %1828 = vmatpush1.msra.mxu0 0.0
      %1829 = vmatprep.subr.mxu0 0.0
      %1830 = vmatpush1.msra.mxu0 0.0
      %1831 = vmatprep.subr.mxu0 0.0
      %1832 = vmatpush1.msra.mxu0 0.0
      %1833 = vmatprep.subr.mxu0 0.0
      %1834 = vmatpush1.msra.mxu0 0.0
      %1835 = vmatprep.subr.mxu0 0.0
      %1836 = vmatpush1.msra.mxu0 0.0
      %1837 = vmatprep.subr.mxu0 0.0
      %1838 = vmatpush1.msra.mxu0 0.0
      %1839 = vmatprep.subr.mxu0 0.0
      %1840 = vmatpush1.msra.mxu0 0.0
      %1841 = vmatprep.subr.mxu0 0.0
      %1842 = vmatpush1.msra.mxu0 0.0
      %1843 = vmatprep.subr.mxu0 0.0
      %1844 = vmatpush1.msra.mxu0 0.0
      %1845 = vmatprep.subr.mxu0 0.0
      %1846 = vmatpush1.msra.mxu0 0.0
      %1847 = vmatprep.subr.mxu0 0.0
      %1848 = vmatpush1.msra.mxu0 0.0
      %1849 = vmatprep.subr.mxu0 0.0
      %1850 = vmatpush1.msra.mxu0 0.0
      %1851 = vmatprep.subr.mxu0 0.0
      %1852 = vmatpush1.msra.mxu0 0.0
      %1853 = vmatprep.mubr.f32.mxu0 %v1716
      %1854 = vmatmul.mubr.f32.gmra.mrb[0].mxu0 %v1635
      %v1855 = vpop.f32.mrb[0].mxu0
      %v1856 = vadd.f32 %v1713, %v1855
      %v1857 = vpop.f32.mrb[0].mxu0
      %v1858 = vadd.f32 %v1713, %v1857
      %1859 = vdwg.mxu0
      %v1860 = vmax.f32 %v1785, 0.0
      %v1861 = vmax.f32 %v1787, 0.0
      %v1862 = vmax.f32 %v1856, 0.0
      %v1863 = vmax.f32 %v1858, 0.0
      %1864 = vst [vmem:[#allocation2 + $0x40] sm:$0xff] %v1860
      %1865 = vst [vmem:[#allocation2 + $0x48] sm:$0xff] %v1861
      %1866 = vst [vmem:[#allocation2 + $0x50] sm:$0xff] %v1862
      %1867 = vst [vmem:[#allocation2 + $0x58] sm:$0xff] %v1863
      %v1868 = vld [vmem:[%s3 + $0x20] sm:$0xff]
      %v1869 = vld [vmem:[#allocation2] sm:$0xff]
      %v1870 = vld [vmem:[#allocation2 + $0x8] sm:$0xff]
      %v1871 = vld [vmem:[#allocation2 + $0x10] sm:$0xff]
      %v1872 = vld [vmem:[#allocation2 + $0x18] sm:$0xff]
      %v1873 = vld [vmem:[#allocation2 + $0x20] sm:$0xff]
      %v1874 = vld [vmem:[#allocation2 + $0x28] sm:$0xff]
      %v1875 = vld [vmem:[#allocation2 + $0x30] sm:$0xff]
      %v1876 = vld [vmem:[#allocation2 + $0x38] sm:$0xff]
      %v1877 = vld [vmem:[#allocation2 + $0x40] sm:$0xff]
      %v1878 = vld [vmem:[#allocation2 + $0x48] sm:$0xff]
      %v1879 = vld [vmem:[#allocation2 + $0x50] sm:$0xff]
      %v1880 = vld [vmem:[#allocation2 + $0x58] sm:$0xff]
      %v1881 = vld [vmem:[%s5 + $0x30] sm:$0xff]
      %1883 = vset.pattern.permute.xlu0 0
      %1884 = vperm.xlu0 %1883, %v1881
      %v1885 = vpop.permute.xlu0 %1884
      %vm1887 = vcmask 195584
      %v1889 = vsel %vm1887, %v1868, 0
      %1891 = vmatprep.subr.mxu0 %v1870
      %1892 = vmatpush1.msra.mxu0 %v1869
      %1893 = vmatprep.subr.mxu0 %v1874
      %1894 = vmatpush1.msra.mxu0 %v1873
      %1895 = vmatprep.subr.mxu0 %v1878
      %1896 = vmatpush1.msra.mxu0 %v1877
      %1897 = vmatprep.subr.mxu0 0.0
      %1898 = vmatpush1.msra.mxu0 0.0
      %1899 = vmatprep.subr.mxu0 0.0
      %1900 = vmatpush1.msra.mxu0 0.0
      %1901 = vmatprep.subr.mxu0 0.0
      %1902 = vmatpush1.msra.mxu0 0.0
      %1903 = vmatprep.subr.mxu0 0.0
      %1904 = vmatpush1.msra.mxu0 0.0
      %1905 = vmatprep.subr.mxu0 0.0
      %1906 = vmatpush1.msra.mxu0 0.0
      %1907 = vmatprep.subr.mxu0 0.0
      %1908 = vmatpush1.msra.mxu0 0.0
      %1909 = vmatprep.subr.mxu0 0.0
      %1910 = vmatpush1.msra.mxu0 0.0
      %1911 = vmatprep.subr.mxu0 0.0
      %1912 = vmatpush1.msra.mxu0 0.0
      %1913 = vmatprep.subr.mxu0 0.0
      %1914 = vmatpush1.msra.mxu0 0.0
      %1915 = vmatprep.subr.mxu0 0.0
      %1916 = vmatpush1.msra.mxu0 0.0
      %1917 = vmatprep.subr.mxu0 0.0
      %1918 = vmatpush1.msra.mxu0 0.0
      %1919 = vmatprep.subr.mxu0 0.0
      %1920 = vmatpush1.msra.mxu0 0.0
      %1921 = vmatprep.subr.mxu0 0.0
      %1922 = vmatpush1.msra.mxu0 0.0
      %1923 = vmatprep.subr.mxu0 0.0
      %1924 = vmatpush1.msra.mxu0 0.0
      %1925 = vmatprep.subr.mxu0 0.0
      %1926 = vmatpush1.msra.mxu0 0.0
      %1927 = vmatprep.subr.mxu0 0.0
      %1928 = vmatpush1.msra.mxu0 0.0
      %1929 = vmatprep.subr.mxu0 0.0
      %1930 = vmatpush1.msra.mxu0 0.0
      %1931 = vmatprep.subr.mxu0 0.0
      %1932 = vmatpush1.msra.mxu0 0.0
      %1933 = vmatprep.subr.mxu0 0.0
      %1934 = vmatpush1.msra.mxu0 0.0
      %1935 = vmatprep.subr.mxu0 0.0
      %1936 = vmatpush1.msra.mxu0 0.0
      %1937 = vmatprep.subr.mxu0 0.0
      %1938 = vmatpush1.msra.mxu0 0.0
      %1939 = vmatprep.subr.mxu0 0.0
      %1940 = vmatpush1.msra.mxu0 0.0
      %1941 = vmatprep.subr.mxu0 0.0
      %1942 = vmatpush1.msra.mxu0 0.0
      %1943 = vmatprep.subr.mxu0 0.0
      %1944 = vmatpush1.msra.mxu0 0.0
      %1945 = vmatprep.subr.mxu0 0.0
      %1946 = vmatpush1.msra.mxu0 0.0
      %1947 = vmatprep.subr.mxu0 0.0
      %1948 = vmatpush1.msra.mxu0 0.0
      %1949 = vmatprep.subr.mxu0 0.0
      %1950 = vmatpush1.msra.mxu0 0.0
      %1951 = vmatprep.subr.mxu0 0.0
      %1952 = vmatpush1.msra.mxu0 0.0
      %1953 = vmatprep.subr.mxu0 0.0
      %1954 = vmatpush1.msra.mxu0 0.0
      %1955 = vmatprep.mubr.f32.mxu0 0.0
      %1956 = vmatmul.mubr.f32.gmra.mrb[0].mxu0 %v1889
      %v1957 = vpop.f32.mrb[0].mxu0
      %v1958 = vadd.f32 %v1885, %v1957
      %v1959 = vpop.f32.mrb[0].mxu0
      %v1960 = vadd.f32 %v1885, %v1959
      %1961 = vdwg.mxu0
      %1962 = vmatprep.subr.mxu0 %v1872
      %1963 = vmatpush1.msra.mxu0 %v1871
      %1964 = vmatprep.subr.mxu0 %v1876
      %1965 = vmatpush1.msra.mxu0 %v1875
      %1966 = vmatprep.subr.mxu0 %v1880
      %1967 = vmatpush1.msra.mxu0 %v1879
      %1968 = vmatprep.subr.mxu0 0.0
      %1969 = vmatpush1.msra.mxu0 0.0
      %1970 = vmatprep.subr.mxu0 0.0
      %1971 = vmatpush1.msra.mxu0 0.0
      %1972 = vmatprep.subr.mxu0 0.0
      %1973 = vmatpush1.msra.mxu0 0.0
      %1974 = vmatprep.subr.mxu0 0.0
      %1975 = vmatpush1.msra.mxu0 0.0
      %1976 = vmatprep.subr.mxu0 0.0
      %1977 = vmatpush1.msra.mxu0 0.0
      %1978 = vmatprep.subr.mxu0 0.0
      %1979 = vmatpush1.msra.mxu0 0.0
      %1980 = vmatprep.subr.mxu0 0.0
      %1981 = vmatpush1.msra.mxu0 0.0
      %1982 = vmatprep.subr.mxu0 0.0
      %1983 = vmatpush1.msra.mxu0 0.0
      %1984 = vmatprep.subr.mxu0 0.0
      %1985 = vmatpush1.msra.mxu0 0.0
      %1986 = vmatprep.subr.mxu0 0.0
      %1987 = vmatpush1.msra.mxu0 0.0
      %1988 = vmatprep.subr.mxu0 0.0
      %1989 = vmatpush1.msra.mxu0 0.0
      %1990 = vmatprep.subr.mxu0 0.0
      %1991 = vmatpush1.msra.mxu0 0.0
      %1992 = vmatprep.subr.mxu0 0.0
      %1993 = vmatpush1.msra.mxu0 0.0
      %1994 = vmatprep.subr.mxu0 0.0
      %1995 = vmatpush1.msra.mxu0 0.0
      %1996 = vmatprep.subr.mxu0 0.0
      %1997 = vmatpush1.msra.mxu0 0.0
      %1998 = vmatprep.subr.mxu0 0.0
      %1999 = vmatpush1.msra.mxu0 0.0
      %2000 = vmatprep.subr.mxu0 0.0
      %2001 = vmatpush1.msra.mxu0 0.0
      %2002 = vmatprep.subr.mxu0 0.0
      %2003 = vmatpush1.msra.mxu0 0.0
      %2004 = vmatprep.subr.mxu0 0.0
      %2005 = vmatpush1.msra.mxu0 0.0
      %2006 = vmatprep.subr.mxu0 0.0
      %2007 = vmatpush1.msra.mxu0 0.0
      %2008 = vmatprep.subr.mxu0 0.0
      %2009 = vmatpush1.msra.mxu0 0.0
      %2010 = vmatprep.subr.mxu0 0.0
      %2011 = vmatpush1.msra.mxu0 0.0
      %2012 = vmatprep.subr.mxu0 0.0
      %2013 = vmatpush1.msra.mxu0 0.0
      %2014 = vmatprep.subr.mxu0 0.0
      %2015 = vmatpush1.msra.mxu0 0.0
      %2016 = vmatprep.subr.mxu0 0.0
      %2017 = vmatpush1.msra.mxu0 0.0
      %2018 = vmatprep.subr.mxu0 0.0
      %2019 = vmatpush1.msra.mxu0 0.0
      %2020 = vmatprep.subr.mxu0 0.0
      %2021 = vmatpush1.msra.mxu0 0.0
      %2022 = vmatprep.subr.mxu0 0.0
      %2023 = vmatpush1.msra.mxu0 0.0
      %2024 = vmatprep.subr.mxu0 0.0
      %2025 = vmatpush1.msra.mxu0 0.0
      %2026 = vmatprep.mubr.f32.mxu0 0.0
      %2027 = vmatmul.mubr.f32.gmra.mrb[0].mxu0 %v1889
      %v2028 = vpop.f32.mrb[0].mxu0
      %v2029 = vadd.f32 %v1885, %v2028
      %v2030 = vpop.f32.mrb[0].mxu0
      %v2031 = vadd.f32 %v1885, %v2030
      %2032 = vdwg.mxu0
      %v2033 = vld [vmem:[%s3 + $0x28] sm:$0xff]
      %v2034 = vld [vmem:[%s5 + $0x38] sm:$0xff]
      %2036 = vset.pattern.permute.xlu0 0
      %2037 = vperm.xlu0 %2036, %v2034
      %v2038 = vpop.permute.xlu0 %2037
      %v2041 = vsel %vm467, %v2033, 0
      %2043 = vmatprep.subr.mxu0 %v1960
      %2044 = vmatpush1.msra.mxu0 %v1958
      %2045 = vmatprep.subr.mxu0 0.0
      %2046 = vmatpush1.msra.mxu0 0.0
      %2047 = vmatprep.subr.mxu0 0.0
      %2048 = vmatpush1.msra.mxu0 0.0
      %2049 = vmatprep.subr.mxu0 0.0
      %2050 = vmatpush1.msra.mxu0 0.0
      %2051 = vmatprep.subr.mxu0 0.0
      %2052 = vmatpush1.msra.mxu0 0.0
      %2053 = vmatprep.subr.mxu0 0.0
      %2054 = vmatpush1.msra.mxu0 0.0
      %2055 = vmatprep.subr.mxu0 0.0
      %2056 = vmatpush1.msra.mxu0 0.0
      %2057 = vmatprep.subr.mxu0 0.0
      %2058 = vmatpush1.msra.mxu0 0.0
      %2059 = vmatprep.subr.mxu0 0.0
      %2060 = vmatpush1.msra.mxu0 0.0
      %2061 = vmatprep.subr.mxu0 0.0
      %2062 = vmatpush1.msra.mxu0 0.0
      %2063 = vmatprep.subr.mxu0 0.0
      %2064 = vmatpush1.msra.mxu0 0.0
      %2065 = vmatprep.subr.mxu0 0.0
      %2066 = vmatpush1.msra.mxu0 0.0
      %2067 = vmatprep.subr.mxu0 0.0
      %2068 = vmatpush1.msra.mxu0 0.0
      %2069 = vmatprep.subr.mxu0 0.0
      %2070 = vmatpush1.msra.mxu0 0.0
      %2071 = vmatprep.subr.mxu0 0.0
      %2072 = vmatpush1.msra.mxu0 0.0
      %2073 = vmatprep.subr.mxu0 0.0
      %2074 = vmatpush1.msra.mxu0 0.0
      %2075 = vmatprep.subr.mxu0 0.0
      %2076 = vmatpush1.msra.mxu0 0.0
      %2077 = vmatprep.subr.mxu0 0.0
      %2078 = vmatpush1.msra.mxu0 0.0
      %2079 = vmatprep.subr.mxu0 0.0
      %2080 = vmatpush1.msra.mxu0 0.0
      %2081 = vmatprep.subr.mxu0 0.0
      %2082 = vmatpush1.msra.mxu0 0.0
      %2083 = vmatprep.subr.mxu0 0.0
      %2084 = vmatpush1.msra.mxu0 0.0
      %2085 = vmatprep.subr.mxu0 0.0
      %2086 = vmatpush1.msra.mxu0 0.0
      %2087 = vmatprep.subr.mxu0 0.0
      %2088 = vmatpush1.msra.mxu0 0.0
      %2089 = vmatprep.subr.mxu0 0.0
      %2090 = vmatpush1.msra.mxu0 0.0
      %2091 = vmatprep.subr.mxu0 0.0
      %2092 = vmatpush1.msra.mxu0 0.0
      %2093 = vmatprep.subr.mxu0 0.0
      %2094 = vmatpush1.msra.mxu0 0.0
      %2095 = vmatprep.subr.mxu0 0.0
      %2096 = vmatpush1.msra.mxu0 0.0
      %2097 = vmatprep.subr.mxu0 0.0
      %2098 = vmatpush1.msra.mxu0 0.0
      %2099 = vmatprep.subr.mxu0 0.0
      %2100 = vmatpush1.msra.mxu0 0.0
      %2101 = vmatprep.subr.mxu0 0.0
      %2102 = vmatpush1.msra.mxu0 0.0
      %2103 = vmatprep.subr.mxu0 0.0
      %2104 = vmatpush1.msra.mxu0 0.0
      %2105 = vmatprep.subr.mxu0 0.0
      %2106 = vmatpush1.msra.mxu0 0.0
      %2107 = vmatprep.mubr.f32.mxu0 0.0
      %2108 = vmatmul.mubr.f32.gmra.mrb[0].mxu0 %v2041
      %v2109 = vpop.f32.mrb[0].mxu0
      %v2110 = vadd.f32 %v2038, %v2109
      %v2111 = vpop.f32.mrb[0].mxu0
      %v2112 = vadd.f32 %v2038, %v2111
      %2113 = vdwg.mxu0
      %2114 = vmatprep.subr.mxu0 %v2031
      %2115 = vmatpush1.msra.mxu0 %v2029
      %2116 = vmatprep.subr.mxu0 0.0
      %2117 = vmatpush1.msra.mxu0 0.0
      %2118 = vmatprep.subr.mxu0 0.0
      %2119 = vmatpush1.msra.mxu0 0.0
      %2120 = vmatprep.subr.mxu0 0.0
      %2121 = vmatpush1.msra.mxu0 0.0
      %2122 = vmatprep.subr.mxu0 0.0
      %2123 = vmatpush1.msra.mxu0 0.0
      %2124 = vmatprep.subr.mxu0 0.0
      %2125 = vmatpush1.msra.mxu0 0.0
      %2126 = vmatprep.subr.mxu0 0.0
      %2127 = vmatpush1.msra.mxu0 0.0
      %2128 = vmatprep.subr.mxu0 0.0
      %2129 = vmatpush1.msra.mxu0 0.0
      %2130 = vmatprep.subr.mxu0 0.0
      %2131 = vmatpush1.msra.mxu0 0.0
      %2132 = vmatprep.subr.mxu0 0.0
      %2133 = vmatpush1.msra.mxu0 0.0
      %2134 = vmatprep.subr.mxu0 0.0
      %2135 = vmatpush1.msra.mxu0 0.0
      %2136 = vmatprep.subr.mxu0 0.0
      %2137 = vmatpush1.msra.mxu0 0.0
      %2138 = vmatprep.subr.mxu0 0.0
      %2139 = vmatpush1.msra.mxu0 0.0
      %2140 = vmatprep.subr.mxu0 0.0
      %2141 = vmatpush1.msra.mxu0 0.0
      %2142 = vmatprep.subr.mxu0 0.0
      %2143 = vmatpush1.msra.mxu0 0.0
      %2144 = vmatprep.subr.mxu0 0.0
      %2145 = vmatpush1.msra.mxu0 0.0
      %2146 = vmatprep.subr.mxu0 0.0
      %2147 = vmatpush1.msra.mxu0 0.0
      %2148 = vmatprep.subr.mxu0 0.0
      %2149 = vmatpush1.msra.mxu0 0.0
      %2150 = vmatprep.subr.mxu0 0.0
      %2151 = vmatpush1.msra.mxu0 0.0
      %2152 = vmatprep.subr.mxu0 0.0
      %2153 = vmatpush1.msra.mxu0 0.0
      %2154 = vmatprep.subr.mxu0 0.0
      %2155 = vmatpush1.msra.mxu0 0.0
      %2156 = vmatprep.subr.mxu0 0.0
      %2157 = vmatpush1.msra.mxu0 0.0
      %2158 = vmatprep.subr.mxu0 0.0
      %2159 = vmatpush1.msra.mxu0 0.0
      %2160 = vmatprep.subr.mxu0 0.0
      %2161 = vmatpush1.msra.mxu0 0.0
      %2162 = vmatprep.subr.mxu0 0.0
      %2163 = vmatpush1.msra.mxu0 0.0
      %2164 = vmatprep.subr.mxu0 0.0
      %2165 = vmatpush1.msra.mxu0 0.0
      %2166 = vmatprep.subr.mxu0 0.0
      %2167 = vmatpush1.msra.mxu0 0.0
      %2168 = vmatprep.subr.mxu0 0.0
      %2169 = vmatpush1.msra.mxu0 0.0
      %2170 = vmatprep.subr.mxu0 0.0
      %2171 = vmatpush1.msra.mxu0 0.0
      %2172 = vmatprep.subr.mxu0 0.0
      %2173 = vmatpush1.msra.mxu0 0.0
      %2174 = vmatprep.subr.mxu0 0.0
      %2175 = vmatpush1.msra.mxu0 0.0
      %2176 = vmatprep.subr.mxu0 0.0
      %2177 = vmatpush1.msra.mxu0 0.0
      %2178 = vmatprep.mubr.f32.mxu0 0.0
      %2179 = vmatmul.mubr.f32.gmra.mrb[0].mxu0 %v2041
      %v2180 = vpop.f32.mrb[0].mxu0
      %v2181 = vadd.f32 %v2038, %v2180
      %v2182 = vpop.f32.mrb[0].mxu0
      %v2183 = vadd.f32 %v2038, %v2182
      %2184 = vdwg.mxu0
      %2185 = vst [vmem:[%s271] sm:$0xff] %v2110
      %2186 = vst [vmem:[%s271 + $0x8] sm:$0xff] %v2112
      %2187 = vst [vmem:[%s271 + $0x10] sm:$0xff] %v2181
      %2188 = vst [vmem:[%s271 + $0x18] sm:$0xff] %v2183
      %p2189 = scmp.lt.s32.totalorder %s17, 1
      %s2190 = scalar_select %p2189, %s17, 1
      %s2191 = smul.addr %s2190, 4
      %s2192 = smul.addr %s2191, 8
      %s2193 = scalar_lea.vmem %s6, %s2192
      // Predicated region
      $region45: #{context_init_forward.1} parent=43 // pred_check
        %p2194 = pneg %p171
      $region46: #{context_init_forward.1} parent=43 // pred_check_branch
        %2196 = sbr.rel (%p2194) target = $region48
      $region47: #{context_init_forward.1} parent=43 // pred_region
        _
      $region48: #{context_init_forward.1} parent=43 // pred_fallthru
        _
    $region44: #{context_init_forward.1} parent=5 // pred_fallthru
      _
    %p2197 = scmp.le.s32.totalorder 2, %s12
    // Predicated region
    $region49: #{context_init_forward.1} parent=5 // pred_check
      %p2198 = pneg %p2197
    $region50: #{context_init_forward.1} parent=5 // pred_check_branch
      %2200 = sbr.rel (%p2198) target = $region52
    $region51: #{context_init_forward.1} parent=5 // pred_region
      %s2201 = ssub.s32 %s12, 2
      // Predicated region
      $region53: #{context_init_forward.1} parent=51 // pred_check
        %p2202 = pneg %p177
      $region54: #{context_init_forward.1} parent=51 // pred_check_branch
        %2204 = sbr.rel (%p2202) target = $region56
      $region55: #{context_init_forward.1} parent=51 // pred_region
        %p2205 = scmp.lt.s32.totalorder %s18, 1
        %s2206 = scalar_select %p2205, %s18, 1
        %s2207 = smul.addr %s2206, 4
        %s2208 = smul.addr %s2207, 8
        %s2209 = scalar_lea.vmem %s6, %s2208
      $region56: #{context_init_forward.1} parent=51 // pred_fallthru
        _
    $region52: #{context_init_forward.1} parent=5 // pred_fallthru
      _
  $region6: #{context_init_forward.1} parent=0 // loop_footer
    %s16 = sadd.s32 1, %s12
  $region7: #{context_init_forward.1} parent=0 // loop_footer_branch
    %11 = sbr.rel target = $region3
  $region8: #{context_init_forward.1} parent=0 // loop_exit
    _

</llo_original>
